<compile_context>
chip_gen: v7x
topology: tpu7x:2x2x1
jax: 0.10.0
libtpu: 0.0.40
codegen_flags: <defaults>
</compile_context>

<pallas_src>
import functools

import jax
import jax.numpy as jnp
from jax.experimental import pallas as pl
from jax.experimental.pallas import tpu as pltpu

BN_EPS = 1e-5


# -----------------------------------------------------------------------------
# Pallas kernel: direct conv (kh*kw shifted matmuls) + folded BN
#   [+ identity residual | + fused 1x1-conv shortcut] [+ ReLU] [+ fused global pool]
# -----------------------------------------------------------------------------
def _conv_bn_kernel(*refs, kh, kw, stride, n, ho, wo,
                    residual_mode, apply_relu, global_pool):
    x_ref, w_ref, s_ref, b_ref = refs[:4]
    o_ref = refs[-1]
    r_ref = xs_ref = ws_ref = ss_ref = bs_ref = None
    if residual_mode == "identity":
        r_ref = refs[4]
    elif residual_mode == "conv":
        xs_ref, ws_ref, ss_ref, bs_ref = refs[4:8]

    m = ho * n * wo                       # output rows, ordered (ho, n, wo)
    tn = w_ref.shape[-1]

    acc = jnp.zeros((m, tn), jnp.float32)
    # Unrolled tap loop: each tap is a (m, cin) x (cin, tn) matmul on the MXU,
    # accumulated in f32.  The input ref is pre-arranged so every tap is a
    # static, contiguous row-slice (no in-kernel reshape needed).
    for i in range(kh):
        for j in range(kw):
            pi, pj = i % stride, j % stride
            qi, qj = i // stride, j // stride
            patches = x_ref[qj, pi, pj, pl.ds(qi * n * wo, m), :]   # (m, cin) bf16
            wk = w_ref[i, j]                                        # (cin, tn) bf16
            acc = acc + jnp.dot(patches, wk,
                                preferred_element_type=jnp.float32)

    # Folded-BN epilogue in f32 (v5e-safe), optional residual + ReLU.
    y = acc * s_ref[...] + b_ref[...]
    if residual_mode == "identity":
        y = y + r_ref[...].astype(jnp.float32)
    elif residual_mode == "conv":
        # Fused 1x1 projection shortcut: strided input rows x (cin_sc, tn) weights,
        # then its own folded-BN scale/bias -- all on the MXU / VPU, no HBM bounce.
        res = jnp.dot(xs_ref[...], ws_ref[...],
                      preferred_element_type=jnp.float32)
        y = y + (res * ss_ref[...] + bs_ref[...])
    if apply_relu:
        y = jnp.maximum(y, 0.0)

    if global_pool:
        # Fused AdaptiveAvgPool2d((1,1)): mean over (ho, wo) per image, done as a
        # tiny averaging matmul (rows are ordered (ho, n, wo)).
        inv = 1.0 / float(ho * wo)
        row = jax.lax.broadcasted_iota(jnp.int32, (n, m), 0)
        col = jax.lax.broadcasted_iota(jnp.int32, (n, m), 1)
        avg = jnp.where((col // wo) % n == row, inv, 0.0)
        o_ref[...] = jnp.dot(avg, y,
                             preferred_element_type=jnp.float32).astype(o_ref.dtype)
    else:
        o_ref[...] = y.astype(o_ref.dtype)


# -----------------------------------------------------------------------------
# Plain-JAX glue: padding + stride phase-split + kw-fold (cheap, ~1-3x activation)
# -----------------------------------------------------------------------------
def _prep_conv_input(x, kh, kw, stride, pad):
    """NHWC -> (Qj, Si, Sj, Hq*N*Wo, C) so each conv tap is a contiguous row slice."""
    N, H, W, C = x.shape
    Ho = (H + 2 * pad - kh) // stride + 1
    Wo = (W + 2 * pad - kw) // stride + 1
    Si = min(kh, stride)
    Sj = min(kw, stride)
    Qi = (kh - 1) // stride + 1
    Qj = (kw - 1) // stride + 1
    Hq = Qi - 1 + Ho
    Wq = Qj - 1 + Wo
    Hp = (Si - 1) + stride * (Hq - 1) + 1
    Wp = (Sj - 1) + stride * (Wq - 1) + 1
    xp = jnp.pad(x, ((0, 0),
                     (pad, max(0, Hp - H - pad)),
                     (pad, max(0, Wp - W - pad)),
                     (0, 0)))
    slabs = []
    for qj in range(Qj):
        per_pi = []
        for pi in range(Si):
            per_pj = []
            for pj in range(Sj):
                ph = xp[:, pi::stride, pj::stride, :][:, :Hq, :Wq, :]   # (N,Hq,Wq,C)
                win = ph[:, :, qj:qj + Wo, :]                           # (N,Hq,Wo,C)
                per_pj.append(jnp.transpose(win, (1, 0, 2, 3)))         # (Hq,N,Wo,C)
            per_pi.append(jnp.stack(per_pj, axis=0))
        slabs.append(jnp.stack(per_pi, axis=0))
    xk = jnp.stack(slabs, axis=0)                       # (Qj,Si,Sj,Hq,N,Wo,C)
    xk = xk.reshape(Qj, Si, Sj, Hq * N * Wo, C)
    return xk.astype(jnp.bfloat16), Ho, Wo


def _rows_to_nhwc(y_rows, n, ho, wo):
    c = y_rows.shape[-1]
    return jnp.transpose(y_rows.reshape(ho, n, wo, c), (1, 0, 2, 3))


def _nhwc_to_rows(x):
    n, h, w, c = x.shape
    return jnp.transpose(x, (1, 0, 2, 3)).reshape(h * n * w, c)


def _pick_tn(cout):
    # Lane-dense tiles; >=2 parallel tiles on channel-heavy layers (v7x megacore).
    if cout % 256 == 0 and cout // 256 >= 2:
        return 256
    if cout % 128 == 0 and cout // 128 >= 2:
        return 128
    if cout % 128 == 0:
        return 128
    return cout


# -----------------------------------------------------------------------------
# Fused conv+BN(+residual / fused conv-shortcut)(+ReLU)(+GAP) wrapper
# -----------------------------------------------------------------------------
def conv_bn(x_nhwc, params, *, stride, pad, apply_relu,
            residual_rows=None, shortcut=None, global_pool=False):
    w = params["w"]                          # (kh, kw, cin, cout) bf16
    kh, kw, cin, cout = w.shape
    N = x_nhwc.shape[0]

    xk, Ho, Wo = _prep_conv_input(x_nhwc, kh, kw, stride, pad)
    M = Ho * N * Wo
    tn = _pick_tn(cout)
    grid = (cout // tn,)

    residual_mode = "none"
    if residual_rows is not None:
        residual_mode = "identity"
    if shortcut is not None:
        residual_mode = "conv"

    kernel = functools.partial(
        _conv_bn_kernel, kh=kh, kw=kw, stride=stride, n=N, ho=Ho, wo=Wo,
        residual_mode=residual_mode, apply_relu=apply_relu,
        global_pool=global_pool)

    in_specs = [
        pl.BlockSpec(xk.shape, lambda t: (0, 0, 0, 0, 0)),
        pl.BlockSpec((kh, kw, cin, tn), lambda t: (0, 0, 0, t)),
        pl.BlockSpec((1, tn), lambda t: (0, t)),
        pl.BlockSpec((1, tn), lambda t: (0, t)),
    ]
    args = [xk, w, params["scale"], params["bias"]]
    flops = 2 * M * kh * kw * cin * cout
    bytes_accessed = xk.size * 2 + w.size * 2 + (cout * 2) * 4

    if residual_mode == "identity":
        in_specs.append(pl.BlockSpec((M, tn), lambda t: (0, t)))
        args.append(residual_rows)
        bytes_accessed += residual_rows.size * 2
    elif residual_mode == "conv":
        xs_rows = shortcut["xs_rows"]            # (M, cin_sc) bf16, output-row order
        ws = shortcut["w"]                       # (cin_sc, cout) bf16
        cin_sc = xs_rows.shape[-1]
        in_specs += [
            pl.BlockSpec((M, cin_sc), lambda t: (0, 0)),
            pl.BlockSpec((cin_sc, tn), lambda t: (0, t)),
            pl.BlockSpec((1, tn), lambda t: (0, t)),
            pl.BlockSpec((1, tn), lambda t: (0, t)),
        ]
        args += [xs_rows, ws, shortcut["scale"], shortcut["bias"]]
        flops += 2 * M * cin_sc * cout
        bytes_accessed += xs_rows.size * 2 + ws.size * 2 + (cout * 2) * 4

    if global_pool:
        out_shape = jax.ShapeDtypeStruct((N, cout), jnp.float32)
        out_specs = pl.BlockSpec((N, tn), lambda t: (0, t))
        bytes_accessed += N * cout * 4
    else:
        out_shape = jax.ShapeDtypeStruct((M, cout), jnp.bfloat16)
        out_specs = pl.BlockSpec((M, tn), lambda t: (0, t))
        bytes_accessed += M * cout * 2

    out = pl.pallas_call(
        kernel,
        out_shape=out_shape,
        grid=grid,
        in_specs=in_specs,
        out_specs=out_specs,
        compiler_params=pltpu.CompilerParams(
            dimension_semantics=("parallel",)),
        cost_estimate=pl.CostEstimate(
            flops=flops, transcendentals=0, bytes_accessed=bytes_accessed),
    )(*args)
    return out, Ho, Wo


# -----------------------------------------------------------------------------
# ResNet18 structure
# -----------------------------------------------------------------------------
def residual_layer_forward(x_nhwc, lp, *, final_pool=False):
    stride = lp["stride"]
    N = x_nhwc.shape[0]

    h_rows, Ho, Wo = conv_bn(x_nhwc, lp["cb1"], stride=stride, pad=1,
                             apply_relu=True)
    h_nhwc = _rows_to_nhwc(h_rows, N, Ho, Wo)

    residual_rows = None
    shortcut = None
    if lp["shortcut"] is None:
        residual_rows = _nhwc_to_rows(x_nhwc)            # identity shortcut
    else:
        sc = lp["shortcut"]
        # 1x1 stride-s conv shortcut: its input is just the strided samples of x,
        # arranged in the same (ho, n, wo) row order as the cb2 output rows.
        xs = x_nhwc[:, ::stride, ::stride, :][:, :Ho, :Wo, :]
        shortcut = {"xs_rows": _nhwc_to_rows(xs).astype(jnp.bfloat16),
                    "w": sc["w"][0, 0],                  # (cin_sc, cout) bf16
                    "scale": sc["scale"], "bias": sc["bias"]}

    out, Ho2, Wo2 = conv_bn(h_nhwc, lp["cb2"], stride=1, pad=1, apply_relu=True,
                            residual_rows=residual_rows, shortcut=shortcut,
                            global_pool=final_pool)
    if final_pool:
        return out                                       # (N, Cout) f32 features
    return _rows_to_nhwc(out, N, Ho2, Wo2)


def resnet18_forward(params, x_nchw):
    x = jnp.transpose(x_nchw, (0, 2, 3, 1)).astype(jnp.bfloat16)   # NCHW -> NHWC
    N = x.shape[0]
    h_rows, Ho, Wo = conv_bn(x, params["stem"], stride=1, pad=1, apply_relu=True)
    x = _rows_to_nhwc(h_rows, N, Ho, Wo)
    n_layers = len(params["layers"])
    for idx, lp in enumerate(params["layers"]):
        x = residual_layer_forward(x, lp, final_pool=(idx == n_layers - 1))
    return x                                             # (N, dim_out) f32


# -----------------------------------------------------------------------------
# Deterministic parameter initialization (synthetic; no checkpoint loading)
# -----------------------------------------------------------------------------
def _init_conv_bn(key, cin, cout, k):
    k1, k2, k3 = jax.random.split(key, 3)
    fan_in = k * k * cin
    w = jax.random.normal(k1, (k, k, cin, cout), jnp.float32) * jnp.sqrt(2.0 / fan_in)
    gamma = 1.0 + 0.1 * jax.random.normal(k2, (cout,), jnp.float32)
    beta = 0.1 * jax.random.normal(k3, (cout,), jnp.float32)
    running_mean = jnp.zeros((cout,), jnp.float32)
    running_var = jnp.ones((cout,), jnp.float32)
    scale = gamma / jnp.sqrt(running_var + BN_EPS)
    bias = beta - running_mean * scale
    return {"w": w.astype(jnp.bfloat16),
            "scale": scale.reshape(1, cout),
            "bias": bias.reshape(1, cout)}


def init_resnet18_params(key, dim_out_encoder=512):
    keys = iter(jax.random.split(key, 64))
    params = {"stem": _init_conv_bn(next(keys), 3, 64, 3), "layers": []}
    cfg = [  # (cin, cout, stride, use_shortcut_conv)
        (64, 64, 1, False), (64, 64, 1, False),
        (64, 128, 2, True), (128, 128, 1, False),
        (128, 256, 2, True), (256, 256, 1, False),
        (256, dim_out_encoder, 2, True), (dim_out_encoder, dim_out_encoder, 1, False),
    ]
    for cin, cout, stride, use_sc in cfg:
        need_sc = use_sc or (cin != cout) or (stride != 1)
        lp = {
            "stride": stride,
            "cb1": _init_conv_bn(next(keys), cin, cout, 3),
            "cb2": _init_conv_bn(next(keys), cout, cout, 3),
            "shortcut": _init_conv_bn(next(keys), cin, cout, 1) if need_sc else None,
        }
        params["layers"].append(lp)
    return params


# -----------------------------------------------------------------------------
# Small pure-JAX reference (for a light numerical sanity check only)
# -----------------------------------------------------------------------------
def _ref_conv_bn(x_nhwc, p, *, stride, pad, apply_relu):
    y = jax.lax.conv_general_dilated(
        x_nhwc.astype(jnp.float32), p["w"].astype(jnp.float32),
        window_strides=(stride, stride),
        padding=[(pad, pad), (pad, pad)],
        dimension_numbers=("NHWC", "HWIO", "NHWC"))
    y = y * p["scale"].reshape(1, 1, 1, -1) + p["bias"].reshape(1, 1, 1, -1)
    if apply_relu:
        y = jnp.maximum(y, 0.0)
    return y


def _ref_residual_layer(x_nhwc, lp):
    stride = lp["stride"]
    if lp["shortcut"] is None:
        res = x_nhwc.astype(jnp.float32)
    else:
        res = _ref_conv_bn(x_nhwc, lp["shortcut"], stride=stride, pad=0,
                           apply_relu=False)
    h = _ref_conv_bn(x_nhwc, lp["cb1"], stride=stride, pad=1, apply_relu=True)
    h = h.astype(jnp.bfloat16)          # kernel stores the intermediate as bf16
    y = _ref_conv_bn(h, lp["cb2"], stride=1, pad=1, apply_relu=False)
    return jnp.maximum(y + res, 0.0)


# -----------------------------------------------------------------------------
if __name__ == "__main__":
    key = jax.random.PRNGKey(0)
    pkey, xkey, ckey = jax.random.split(key, 3)
    params = init_resnet18_params(pkey, dim_out_encoder=512)

    # Numerical sanity check of the fused conv/BN/residual kernel (stride-2 layer
    # with the fused 1x1-conv shortcut) against an XLA conv reference.
    lp_chk = params["layers"][2]                     # 64 -> 128, stride 2, conv sc
    xr = jax.random.normal(ckey, (2, 8, 8, 64), jnp.float32).astype(jnp.bfloat16)
    got = jax.jit(lambda a: residual_layer_forward(a, lp_chk))(xr)
    ref = jax.jit(lambda a: _ref_residual_layer(a, lp_chk))(xr)
    got = jax.block_until_ready(got).astype(jnp.float32)
    assert got.shape == ref.shape, (got.shape, ref.shape)
    assert jnp.allclose(got, ref, rtol=5e-2, atol=5e-2), \
        float(jnp.max(jnp.abs(got - ref)))

    # Small input consistent with the module: NCHW, 3 input channels.
    x = jax.random.normal(xkey, (2, 3, 16, 16), jnp.float32)

    fwd = jax.jit(lambda inp: resnet18_forward(params, inp))
    feat = fwd(x)
    feat = jax.block_until_ready(feat)

    assert feat.shape == (2, 512), feat.shape
    assert jnp.all(jnp.isfinite(feat))
    print("KERNEL_OK")
</pallas_src>

<mosaic_0001>
module attributes {stable_mosaic.version = 11 : i64} {
  func.func @_conv_bn_kernel(%arg0: i32, %arg1: memref<2x2x2x40x64xbf16, #tpu.memory_space<vmem>>, %arg2: memref<3x3x64x128xbf16, #tpu.memory_space<vmem>>, %arg3: memref<1x128xf32, #tpu.memory_space<vmem>>, %arg4: memref<1x128xf32, #tpu.memory_space<vmem>>, %arg5: memref<32x128xbf16, #tpu.memory_space<vmem>>) attributes {dimension_semantics = [#tpu.dimension_semantics<parallel>], iteration_bounds = array<i64: 1>, scalar_prefetch = 0 : i64, scratch_operands = 0 : i64, tpu.core_type = #tpu.core_type<tc>, window_params = [{pipeline_mode = #tpu.pipeline_mode<synchronous>, transform_indices = @transform_0, window_bounds = array<i64: 2, 2, 2, 40, 64>}, {transform_indices = @transform_1, window_bounds = array<i64: 3, 3, 64, 128>}, {transform_indices = @transform_2, window_bounds = array<i64: 1, 128>}, {transform_indices = @transform_3, window_bounds = array<i64: 1, 128>}, {transform_indices = @transform_4, window_bounds = array<i64: 32, 128>}]} {
    %cst = arith.constant 0.000000e+00 : f32
    %0 = vector.broadcast %cst : f32 to vector<32x128xf32>
    %c0 = arith.constant 0 : index
    %c0_0 = arith.constant 0 : index
    %c0_1 = arith.constant 0 : index
    %c0_2 = arith.constant 0 : index
    %c0_3 = arith.constant 0 : index
    %1 = vector.load %arg1[%c0, %c0_0, %c0_1, %c0_2, %c0_3] : memref<2x2x2x40x64xbf16, #tpu.memory_space<vmem>>, vector<1x1x1x32x64xbf16>
    %2 = vector.shape_cast %1 : vector<1x1x1x32x64xbf16> to vector<32x64xbf16>
    %c0_4 = arith.constant 0 : index
    %c0_5 = arith.constant 0 : index
    %c0_6 = arith.constant 0 : index
    %c0_7 = arith.constant 0 : index
    %3 = vector.load %arg2[%c0_4, %c0_5, %c0_6, %c0_7] : memref<3x3x64x128xbf16, #tpu.memory_space<vmem>>, vector<1x1x64x128xbf16>
    %4 = vector.shape_cast %3 : vector<1x1x64x128xbf16> to vector<64x128xbf16>
    %cst_8 = arith.constant dense<0.000000e+00> : vector<32x128xf32>
    %5 = tpu.matmul %2, %4, %cst_8 {dimension_numbers = #tpu.dot_dimension_numbers<[1], [0], [0], [1], [0, 0, 1, 1], [], []>} : vector<32x64xbf16>, vector<64x128xbf16>, vector<32x128xf32> -> vector<32x128xf32>
    %6 = arith.addf %0, %5 : vector<32x128xf32>
    %c0_9 = arith.constant 0 : index
    %c0_10 = arith.constant 0 : index
    %c1 = arith.constant 1 : index
    %c0_11 = arith.constant 0 : index
    %c0_12 = arith.constant 0 : index
    %7 = vector.load %arg1[%c0_9, %c0_10, %c1, %c0_11, %c0_12] : memref<2x2x2x40x64xbf16, #tpu.memory_space<vmem>>, vector<1x1x1x32x64xbf16>
    %8 = vector.shape_cast %7 : vector<1x1x1x32x64xbf16> to vector<32x64xbf16>
    %c0_13 = arith.constant 0 : index
    %c1_14 = arith.constant 1 : index
    %c0_15 = arith.constant 0 : index
    %c0_16 = arith.constant 0 : index
    %9 = vector.load %arg2[%c0_13, %c1_14, %c0_15, %c0_16] : memref<3x3x64x128xbf16, #tpu.memory_space<vmem>>, vector<1x1x64x128xbf16>
    %10 = vector.shape_cast %9 : vector<1x1x64x128xbf16> to vector<64x128xbf16>
    %cst_17 = arith.constant dense<0.000000e+00> : vector<32x128xf32>
    %11 = tpu.matmul %8, %10, %cst_17 {dimension_numbers = #tpu.dot_dimension_numbers<[1], [0], [0], [1], [0, 0, 1, 1], [], []>} : vector<32x64xbf16>, vector<64x128xbf16>, vector<32x128xf32> -> vector<32x128xf32>
    %12 = arith.addf %6, %11 : vector<32x128xf32>
    %c1_18 = arith.constant 1 : index
    %c0_19 = arith.constant 0 : index
    %c0_20 = arith.constant 0 : index
    %c0_21 = arith.constant 0 : index
    %c0_22 = arith.constant 0 : index
    %13 = vector.load %arg1[%c1_18, %c0_19, %c0_20, %c0_21, %c0_22] : memref<2x2x2x40x64xbf16, #tpu.memory_space<vmem>>, vector<1x1x1x32x64xbf16>
    %14 = vector.shape_cast %13 : vector<1x1x1x32x64xbf16> to vector<32x64xbf16>
    %c0_23 = arith.constant 0 : index
    %c2 = arith.constant 2 : index
    %c0_24 = arith.constant 0 : index
    %c0_25 = arith.constant 0 : index
    %15 = vector.load %arg2[%c0_23, %c2, %c0_24, %c0_25] : memref<3x3x64x128xbf16, #tpu.memory_space<vmem>>, vector<1x1x64x128xbf16>
    %16 = vector.shape_cast %15 : vector<1x1x64x128xbf16> to vector<64x128xbf16>
    %cst_26 = arith.constant dense<0.000000e+00> : vector<32x128xf32>
    %17 = tpu.matmul %14, %16, %cst_26 {dimension_numbers = #tpu.dot_dimension_numbers<[1], [0], [0], [1], [0, 0, 1, 1], [], []>} : vector<32x64xbf16>, vector<64x128xbf16>, vector<32x128xf32> -> vector<32x128xf32>
    %18 = arith.addf %12, %17 : vector<32x128xf32>
    %c0_27 = arith.constant 0 : index
    %c1_28 = arith.constant 1 : index
    %c0_29 = arith.constant 0 : index
    %c0_30 = arith.constant 0 : index
    %c0_31 = arith.constant 0 : index
    %19 = vector.load %arg1[%c0_27, %c1_28, %c0_29, %c0_30, %c0_31] : memref<2x2x2x40x64xbf16, #tpu.memory_space<vmem>>, vector<1x1x1x32x64xbf16>
    %20 = vector.shape_cast %19 : vector<1x1x1x32x64xbf16> to vector<32x64xbf16>
    %c1_32 = arith.constant 1 : index
    %c0_33 = arith.constant 0 : index
    %c0_34 = arith.constant 0 : index
    %c0_35 = arith.constant 0 : index
    %21 = vector.load %arg2[%c1_32, %c0_33, %c0_34, %c0_35] : memref<3x3x64x128xbf16, #tpu.memory_space<vmem>>, vector<1x1x64x128xbf16>
    %22 = vector.shape_cast %21 : vector<1x1x64x128xbf16> to vector<64x128xbf16>
    %cst_36 = arith.constant dense<0.000000e+00> : vector<32x128xf32>
    %23 = tpu.matmul %20, %22, %cst_36 {dimension_numbers = #tpu.dot_dimension_numbers<[1], [0], [0], [1], [0, 0, 1, 1], [], []>} : vector<32x64xbf16>, vector<64x128xbf16>, vector<32x128xf32> -> vector<32x128xf32>
    %24 = arith.addf %18, %23 : vector<32x128xf32>
    %c0_37 = arith.constant 0 : index
    %c1_38 = arith.constant 1 : index
    %c1_39 = arith.constant 1 : index
    %c0_40 = arith.constant 0 : index
    %c0_41 = arith.constant 0 : index
    %25 = vector.load %arg1[%c0_37, %c1_38, %c1_39, %c0_40, %c0_41] : memref<2x2x2x40x64xbf16, #tpu.memory_space<vmem>>, vector<1x1x1x32x64xbf16>
    %26 = vector.shape_cast %25 : vector<1x1x1x32x64xbf16> to vector<32x64xbf16>
    %c1_42 = arith.constant 1 : index
    %c1_43 = arith.constant 1 : index
    %c0_44 = arith.constant 0 : index
    %c0_45 = arith.constant 0 : index
    %27 = vector.load %arg2[%c1_42, %c1_43, %c0_44, %c0_45] : memref<3x3x64x128xbf16, #tpu.memory_space<vmem>>, vector<1x1x64x128xbf16>
    %28 = vector.shape_cast %27 : vector<1x1x64x128xbf16> to vector<64x128xbf16>
    %cst_46 = arith.constant dense<0.000000e+00> : vector<32x128xf32>
    %29 = tpu.matmul %26, %28, %cst_46 {dimension_numbers = #tpu.dot_dimension_numbers<[1], [0], [0], [1], [0, 0, 1, 1], [], []>} : vector<32x64xbf16>, vector<64x128xbf16>, vector<32x128xf32> -> vector<32x128xf32>
    %30 = arith.addf %24, %29 : vector<32x128xf32>
    %c1_47 = arith.constant 1 : index
    %c1_48 = arith.constant 1 : index
    %c0_49 = arith.constant 0 : index
    %c0_50 = arith.constant 0 : index
    %c0_51 = arith.constant 0 : index
    %31 = vector.load %arg1[%c1_47, %c1_48, %c0_49, %c0_50, %c0_51] : memref<2x2x2x40x64xbf16, #tpu.memory_space<vmem>>, vector<1x1x1x32x64xbf16>
    %32 = vector.shape_cast %31 : vector<1x1x1x32x64xbf16> to vector<32x64xbf16>
    %c1_52 = arith.constant 1 : index
    %c2_53 = arith.constant 2 : index
    %c0_54 = arith.constant 0 : index
    %c0_55 = arith.constant 0 : index
    %33 = vector.load %arg2[%c1_52, %c2_53, %c0_54, %c0_55] : memref<3x3x64x128xbf16, #tpu.memory_space<vmem>>, vector<1x1x64x128xbf16>
    %34 = vector.shape_cast %33 : vector<1x1x64x128xbf16> to vector<64x128xbf16>
    %cst_56 = arith.constant dense<0.000000e+00> : vector<32x128xf32>
    %35 = tpu.matmul %32, %34, %cst_56 {dimension_numbers = #tpu.dot_dimension_numbers<[1], [0], [0], [1], [0, 0, 1, 1], [], []>} : vector<32x64xbf16>, vector<64x128xbf16>, vector<32x128xf32> -> vector<32x128xf32>
    %36 = arith.addf %30, %35 : vector<32x128xf32>
    %c0_57 = arith.constant 0 : index
    %c0_58 = arith.constant 0 : index
    %c0_59 = arith.constant 0 : index
    %c8 = arith.constant 8 : index
    %c0_60 = arith.constant 0 : index
    %37 = vector.load %arg1[%c0_57, %c0_58, %c0_59, %c8, %c0_60] : memref<2x2x2x40x64xbf16, #tpu.memory_space<vmem>>, vector<1x1x1x32x64xbf16>
    %38 = vector.shape_cast %37 : vector<1x1x1x32x64xbf16> to vector<32x64xbf16>
    %c2_61 = arith.constant 2 : index
    %c0_62 = arith.constant 0 : index
    %c0_63 = arith.constant 0 : index
    %c0_64 = arith.constant 0 : index
    %39 = vector.load %arg2[%c2_61, %c0_62, %c0_63, %c0_64] : memref<3x3x64x128xbf16, #tpu.memory_space<vmem>>, vector<1x1x64x128xbf16>
    %40 = vector.shape_cast %39 : vector<1x1x64x128xbf16> to vector<64x128xbf16>
    %cst_65 = arith.constant dense<0.000000e+00> : vector<32x128xf32>
    %41 = tpu.matmul %38, %40, %cst_65 {dimension_numbers = #tpu.dot_dimension_numbers<[1], [0], [0], [1], [0, 0, 1, 1], [], []>} : vector<32x64xbf16>, vector<64x128xbf16>, vector<32x128xf32> -> vector<32x128xf32>
    %42 = arith.addf %36, %41 : vector<32x128xf32>
    %c0_66 = arith.constant 0 : index
    %c0_67 = arith.constant 0 : index
    %c1_68 = arith.constant 1 : index
    %c8_69 = arith.constant 8 : index
    %c0_70 = arith.constant 0 : index
    %43 = vector.load %arg1[%c0_66, %c0_67, %c1_68, %c8_69, %c0_70] : memref<2x2x2x40x64xbf16, #tpu.memory_space<vmem>>, vector<1x1x1x32x64xbf16>
    %44 = vector.shape_cast %43 : vector<1x1x1x32x64xbf16> to vector<32x64xbf16>
    %c2_71 = arith.constant 2 : index
    %c1_72 = arith.constant 1 : index
    %c0_73 = arith.constant 0 : index
    %c0_74 = arith.constant 0 : index
    %45 = vector.load %arg2[%c2_71, %c1_72, %c0_73, %c0_74] : memref<3x3x64x128xbf16, #tpu.memory_space<vmem>>, vector<1x1x64x128xbf16>
    %46 = vector.shape_cast %45 : vector<1x1x64x128xbf16> to vector<64x128xbf16>
    %cst_75 = arith.constant dense<0.000000e+00> : vector<32x128xf32>
    %47 = tpu.matmul %44, %46, %cst_75 {dimension_numbers = #tpu.dot_dimension_numbers<[1], [0], [0], [1], [0, 0, 1, 1], [], []>} : vector<32x64xbf16>, vector<64x128xbf16>, vector<32x128xf32> -> vector<32x128xf32>
    %48 = arith.addf %42, %47 : vector<32x128xf32>
    %c1_76 = arith.constant 1 : index
    %c0_77 = arith.constant 0 : index
    %c0_78 = arith.constant 0 : index
    %c8_79 = arith.constant 8 : index
    %c0_80 = arith.constant 0 : index
    %49 = vector.load %arg1[%c1_76, %c0_77, %c0_78, %c8_79, %c0_80] : memref<2x2x2x40x64xbf16, #tpu.memory_space<vmem>>, vector<1x1x1x32x64xbf16>
    %50 = vector.shape_cast %49 : vector<1x1x1x32x64xbf16> to vector<32x64xbf16>
    %c2_81 = arith.constant 2 : index
    %c2_82 = arith.constant 2 : index
    %c0_83 = arith.constant 0 : index
    %c0_84 = arith.constant 0 : index
    %51 = vector.load %arg2[%c2_81, %c2_82, %c0_83, %c0_84] : memref<3x3x64x128xbf16, #tpu.memory_space<vmem>>, vector<1x1x64x128xbf16>
    %52 = vector.shape_cast %51 : vector<1x1x64x128xbf16> to vector<64x128xbf16>
    %cst_85 = arith.constant dense<0.000000e+00> : vector<32x128xf32>
    %53 = tpu.matmul %50, %52, %cst_85 {dimension_numbers = #tpu.dot_dimension_numbers<[1], [0], [0], [1], [0, 0, 1, 1], [], []>} : vector<32x64xbf16>, vector<64x128xbf16>, vector<32x128xf32> -> vector<32x128xf32>
    %54 = arith.addf %48, %53 : vector<32x128xf32>
    %c0_86 = arith.constant 0 : index
    %c0_87 = arith.constant 0 : index
    %55 = vector.load %arg3[%c0_86, %c0_87] : memref<1x128xf32, #tpu.memory_space<vmem>>, vector<1x128xf32>
    %56 = vector.broadcast %55 : vector<1x128xf32> to vector<32x128xf32>
    %57 = arith.mulf %54, %56 : vector<32x128xf32>
    %c0_88 = arith.constant 0 : index
    %c0_89 = arith.constant 0 : index
    %58 = vector.load %arg4[%c0_88, %c0_89] : memref<1x128xf32, #tpu.memory_space<vmem>>, vector<1x128xf32>
    %59 = vector.broadcast %58 : vector<1x128xf32> to vector<32x128xf32>
    %60 = arith.addf %57, %59 : vector<32x128xf32>
    %cst_90 = arith.constant 0.000000e+00 : f32
    %61 = vector.broadcast %cst_90 : f32 to vector<32x128xf32>
    %62 = arith.maximumf %60, %61 : vector<32x128xf32>
    %63 = arith.truncf %62 : vector<32x128xf32> to vector<32x128xbf16>
    %c0_91 = arith.constant 0 : index
    %c0_92 = arith.constant 0 : index
    %64 = vector.load %arg5[%c0_91, %c0_92] : memref<32x128xbf16, #tpu.memory_space<vmem>>, vector<32x128xbf16>
    tpu.vector_store %arg5[%c0_91, %c0_92], %63 {strides = array<i32>} : memref<32x128xbf16, #tpu.memory_space<vmem>>, vector<32x128xbf16>,
    return
  }
  func.func @transform_0(%arg0: i32) -> (i32, i32, i32, i32, i32) {
    %c0_i32 = arith.constant 0 : i32
    %c0_i32_0 = arith.constant 0 : i32
    %c0_i32_1 = arith.constant 0 : i32
    %c0_i32_2 = arith.constant 0 : i32
    %c0_i32_3 = arith.constant 0 : i32
    %c0_i32_4 = arith.constant 0 : i32
    return %c0_i32, %c0_i32_0, %c0_i32_1, %c0_i32_2, %c0_i32_3 : i32, i32, i32, i32, i32
  }
  func.func @transform_1(%arg0: i32) -> (i32, i32, i32, i32) {
    %c0_i32 = arith.constant 0 : i32
    %c0_i32_0 = arith.constant 0 : i32
    %c0_i32_1 = arith.constant 0 : i32
    %c0_i32_2 = arith.constant 0 : i32
    return %c0_i32, %c0_i32_0, %c0_i32_1, %arg0 : i32, i32, i32, i32
  }
  func.func @transform_2(%arg0: i32) -> (i32, i32) {
    %c0_i32 = arith.constant 0 : i32
    %c0_i32_0 = arith.constant 0 : i32
    return %c0_i32, %arg0 : i32, i32
  }
  func.func @transform_3(%arg0: i32) -> (i32, i32) {
    %c0_i32 = arith.constant 0 : i32
    %c0_i32_0 = arith.constant 0 : i32
    return %c0_i32, %arg0 : i32, i32
  }
  func.func @transform_4(%arg0: i32) -> (i32, i32) {
    %c0_i32 = arith.constant 0 : i32
    %c0_i32_0 = arith.constant 0 : i32
    return %c0_i32, %arg0 : i32, i32
  }
}

module attributes {stable_mosaic.version = 11 : i64} {
  func.func @_conv_bn_kernel(%arg0: i32, %arg1: memref<3x1x1x48x128xbf16, #tpu.memory_space<vmem>>, %arg2: memref<3x3x128x128xbf16, #tpu.memory_space<vmem>>, %arg3: memref<1x128xf32, #tpu.memory_space<vmem>>, %arg4: memref<1x128xf32, #tpu.memory_space<vmem>>, %arg5: memref<32x64xbf16, #tpu.memory_space<vmem>>, %arg6: memref<64x128xbf16, #tpu.memory_space<vmem>>, %arg7: memref<1x128xf32, #tpu.memory_space<vmem>>, %arg8: memref<1x128xf32, #tpu.memory_space<vmem>>, %arg9: memref<32x128xbf16, #tpu.memory_space<vmem>>) attributes {dimension_semantics = [#tpu.dimension_semantics<parallel>], iteration_bounds = array<i64: 1>, scalar_prefetch = 0 : i64, scratch_operands = 0 : i64, tpu.core_type = #tpu.core_type<tc>, window_params = [{pipeline_mode = #tpu.pipeline_mode<synchronous>, transform_indices = @transform_0, window_bounds = array<i64: 3, 1, 1, 48, 128>}, {transform_indices = @transform_1, window_bounds = array<i64: 3, 3, 128, 128>}, {transform_indices = @transform_2, window_bounds = array<i64: 1, 128>}, {transform_indices = @transform_3, window_bounds = array<i64: 1, 128>}, {pipeline_mode = #tpu.pipeline_mode<synchronous>, transform_indices = @transform_4, window_bounds = array<i64: 32, 64>}, {transform_indices = @transform_5, window_bounds = array<i64: 64, 128>}, {transform_indices = @transform_6, window_bounds = array<i64: 1, 128>}, {transform_indices = @transform_7, window_bounds = array<i64: 1, 128>}, {transform_indices = @transform_8, window_bounds = array<i64: 32, 128>}]} {
    %cst = arith.constant 0.000000e+00 : f32
    %0 = vector.broadcast %cst : f32 to vector<32x128xf32>
    %c0 = arith.constant 0 : index
    %c0_0 = arith.constant 0 : index
    %c0_1 = arith.constant 0 : index
    %c0_2 = arith.constant 0 : index
    %c0_3 = arith.constant 0 : index
    %1 = vector.load %arg1[%c0, %c0_0, %c0_1, %c0_2, %c0_3] : memref<3x1x1x48x128xbf16, #tpu.memory_space<vmem>>, vector<1x1x1x32x128xbf16>
    %2 = vector.shape_cast %1 : vector<1x1x1x32x128xbf16> to vector<32x128xbf16>
    %c0_4 = arith.constant 0 : index
    %c0_5 = arith.constant 0 : index
    %c0_6 = arith.constant 0 : index
    %c0_7 = arith.constant 0 : index
    %3 = vector.load %arg2[%c0_4, %c0_5, %c0_6, %c0_7] : memref<3x3x128x128xbf16, #tpu.memory_space<vmem>>, vector<1x1x128x128xbf16>
    %4 = vector.shape_cast %3 : vector<1x1x128x128xbf16> to vector<128x128xbf16>
    %cst_8 = arith.constant dense<0.000000e+00> : vector<32x128xf32>
    %5 = tpu.matmul %2, %4, %cst_8 {dimension_numbers = #tpu.dot_dimension_numbers<[1], [0], [0], [1], [0, 0, 1, 1], [], []>} : vector<32x128xbf16>, vector<128x128xbf16>, vector<32x128xf32> -> vector<32x128xf32>
    %6 = arith.addf %0, %5 : vector<32x128xf32>
    %c1 = arith.constant 1 : index
    %c0_9 = arith.constant 0 : index
    %c0_10 = arith.constant 0 : index
    %c0_11 = arith.constant 0 : index
    %c0_12 = arith.constant 0 : index
    %7 = vector.load %arg1[%c1, %c0_9, %c0_10, %c0_11, %c0_12] : memref<3x1x1x48x128xbf16, #tpu.memory_space<vmem>>, vector<1x1x1x32x128xbf16>
    %8 = vector.shape_cast %7 : vector<1x1x1x32x128xbf16> to vector<32x128xbf16>
    %c0_13 = arith.constant 0 : index
    %c1_14 = arith.constant 1 : index
    %c0_15 = arith.constant 0 : index
    %c0_16 = arith.constant 0 : index
    %9 = vector.load %arg2[%c0_13, %c1_14, %c0_15, %c0_16] : memref<3x3x128x128xbf16, #tpu.memory_space<vmem>>, vector<1x1x128x128xbf16>
    %10 = vector.shape_cast %9 : vector<1x1x128x128xbf16> to vector<128x128xbf16>
    %cst_17 = arith.constant dense<0.000000e+00> : vector<32x128xf32>
    %11 = tpu.matmul %8, %10, %cst_17 {dimension_numbers = #tpu.dot_dimension_numbers<[1], [0], [0], [1], [0, 0, 1, 1], [], []>} : vector<32x128xbf16>, vector<128x128xbf16>, vector<32x128xf32> -> vector<32x128xf32>
    %12 = arith.addf %6, %11 : vector<32x128xf32>
    %c2 = arith.constant 2 : index
    %c0_18 = arith.constant 0 : index
    %c0_19 = arith.constant 0 : index
    %c0_20 = arith.constant 0 : index
    %c0_21 = arith.constant 0 : index
    %13 = vector.load %arg1[%c2, %c0_18, %c0_19, %c0_20, %c0_21] : memref<3x1x1x48x128xbf16, #tpu.memory_space<vmem>>, vector<1x1x1x32x128xbf16>
    %14 = vector.shape_cast %13 : vector<1x1x1x32x128xbf16> to vector<32x128xbf16>
    %c0_22 = arith.constant 0 : index
    %c2_23 = arith.constant 2 : index
    %c0_24 = arith.constant 0 : index
    %c0_25 = arith.constant 0 : index
    %15 = vector.load %arg2[%c0_22, %c2_23, %c0_24, %c0_25] : memref<3x3x128x128xbf16, #tpu.memory_space<vmem>>, vector<1x1x128x128xbf16>
    %16 = vector.shape_cast %15 : vector<1x1x128x128xbf16> to vector<128x128xbf16>
    %cst_26 = arith.constant dense<0.000000e+00> : vector<32x128xf32>
    %17 = tpu.matmul %14, %16, %cst_26 {dimension_numbers = #tpu.dot_dimension_numbers<[1], [0], [0], [1], [0, 0, 1, 1], [], []>} : vector<32x128xbf16>, vector<128x128xbf16>, vector<32x128xf32> -> vector<32x128xf32>
    %18 = arith.addf %12, %17 : vector<32x128xf32>
    %c0_27 = arith.constant 0 : index
    %c0_28 = arith.constant 0 : index
    %c0_29 = arith.constant 0 : index
    %c8 = arith.constant 8 : index
    %c0_30 = arith.constant 0 : index
    %19 = vector.load %arg1[%c0_27, %c0_28, %c0_29, %c8, %c0_30] : memref<3x1x1x48x128xbf16, #tpu.memory_space<vmem>>, vector<1x1x1x32x128xbf16>
    %20 = vector.shape_cast %19 : vector<1x1x1x32x128xbf16> to vector<32x128xbf16>
    %c1_31 = arith.constant 1 : index
    %c0_32 = arith.constant 0 : index
    %c0_33 = arith.constant 0 : index
    %c0_34 = arith.constant 0 : index
    %21 = vector.load %arg2[%c1_31, %c0_32, %c0_33, %c0_34] : memref<3x3x128x128xbf16, #tpu.memory_space<vmem>>, vector<1x1x128x128xbf16>
    %22 = vector.shape_cast %21 : vector<1x1x128x128xbf16> to vector<128x128xbf16>
    %cst_35 = arith.constant dense<0.000000e+00> : vector<32x128xf32>
    %23 = tpu.matmul %20, %22, %cst_35 {dimension_numbers = #tpu.dot_dimension_numbers<[1], [0], [0], [1], [0, 0, 1, 1], [], []>} : vector<32x128xbf16>, vector<128x128xbf16>, vector<32x128xf32> -> vector<32x128xf32>
    %24 = arith.addf %18, %23 : vector<32x128xf32>
    %c1_36 = arith.constant 1 : index
    %c0_37 = arith.constant 0 : index
    %c0_38 = arith.constant 0 : index
    %c8_39 = arith.constant 8 : index
    %c0_40 = arith.constant 0 : index
    %25 = vector.load %arg1[%c1_36, %c0_37, %c0_38, %c8_39, %c0_40] : memref<3x1x1x48x128xbf16, #tpu.memory_space<vmem>>, vector<1x1x1x32x128xbf16>
    %26 = vector.shape_cast %25 : vector<1x1x1x32x128xbf16> to vector<32x128xbf16>
    %c1_41 = arith.constant 1 : index
    %c1_42 = arith.constant 1 : index
    %c0_43 = arith.constant 0 : index
    %c0_44 = arith.constant 0 : index
    %27 = vector.load %arg2[%c1_41, %c1_42, %c0_43, %c0_44] : memref<3x3x128x128xbf16, #tpu.memory_space<vmem>>, vector<1x1x128x128xbf16>
    %28 = vector.shape_cast %27 : vector<1x1x128x128xbf16> to vector<128x128xbf16>
    %cst_45 = arith.constant dense<0.000000e+00> : vector<32x128xf32>
    %29 = tpu.matmul %26, %28, %cst_45 {dimension_numbers = #tpu.dot_dimension_numbers<[1], [0], [0], [1], [0, 0, 1, 1], [], []>} : vector<32x128xbf16>, vector<128x128xbf16>, vector<32x128xf32> -> vector<32x128xf32>
    %30 = arith.addf %24, %29 : vector<32x128xf32>
    %c2_46 = arith.constant 2 : index
    %c0_47 = arith.constant 0 : index
    %c0_48 = arith.constant 0 : index
    %c8_49 = arith.constant 8 : index
    %c0_50 = arith.constant 0 : index
    %31 = vector.load %arg1[%c2_46, %c0_47, %c0_48, %c8_49, %c0_50] : memref<3x1x1x48x128xbf16, #tpu.memory_space<vmem>>, vector<1x1x1x32x128xbf16>
    %32 = vector.shape_cast %31 : vector<1x1x1x32x128xbf16> to vector<32x128xbf16>
    %c1_51 = arith.constant 1 : index
    %c2_52 = arith.constant 2 : index
    %c0_53 = arith.constant 0 : index
    %c0_54 = arith.constant 0 : index
    %33 = vector.load %arg2[%c1_51, %c2_52, %c0_53, %c0_54] : memref<3x3x128x128xbf16, #tpu.memory_space<vmem>>, vector<1x1x128x128xbf16>
    %34 = vector.shape_cast %33 : vector<1x1x128x128xbf16> to vector<128x128xbf16>
    %cst_55 = arith.constant dense<0.000000e+00> : vector<32x128xf32>
    %35 = tpu.matmul %32, %34, %cst_55 {dimension_numbers = #tpu.dot_dimension_numbers<[1], [0], [0], [1], [0, 0, 1, 1], [], []>} : vector<32x128xbf16>, vector<128x128xbf16>, vector<32x128xf32> -> vector<32x128xf32>
    %36 = arith.addf %30, %35 : vector<32x128xf32>
    %c0_56 = arith.constant 0 : index
    %c0_57 = arith.constant 0 : index
    %c0_58 = arith.constant 0 : index
    %c16 = arith.constant 16 : index
    %c0_59 = arith.constant 0 : index
    %37 = vector.load %arg1[%c0_56, %c0_57, %c0_58, %c16, %c0_59] : memref<3x1x1x48x128xbf16, #tpu.memory_space<vmem>>, vector<1x1x1x32x128xbf16>
    %38 = vector.shape_cast %37 : vector<1x1x1x32x128xbf16> to vector<32x128xbf16>
    %c2_60 = arith.constant 2 : index
    %c0_61 = arith.constant 0 : index
    %c0_62 = arith.constant 0 : index
    %c0_63 = arith.constant 0 : index
    %39 = vector.load %arg2[%c2_60, %c0_61, %c0_62, %c0_63] : memref<3x3x128x128xbf16, #tpu.memory_space<vmem>>, vector<1x1x128x128xbf16>
    %40 = vector.shape_cast %39 : vector<1x1x128x128xbf16> to vector<128x128xbf16>
    %cst_64 = arith.constant dense<0.000000e+00> : vector<32x128xf32>
    %41 = tpu.matmul %38, %40, %cst_64 {dimension_numbers = #tpu.dot_dimension_numbers<[1], [0], [0], [1], [0, 0, 1, 1], [], []>} : vector<32x128xbf16>, vector<128x128xbf16>, vector<32x128xf32> -> vector<32x128xf32>
    %42 = arith.addf %36, %41 : vector<32x128xf32>
    %c1_65 = arith.constant 1 : index
    %c0_66 = arith.constant 0 : index
    %c0_67 = arith.constant 0 : index
    %c16_68 = arith.constant 16 : index
    %c0_69 = arith.constant 0 : index
    %43 = vector.load %arg1[%c1_65, %c0_66, %c0_67, %c16_68, %c0_69] : memref<3x1x1x48x128xbf16, #tpu.memory_space<vmem>>, vector<1x1x1x32x128xbf16>
    %44 = vector.shape_cast %43 : vector<1x1x1x32x128xbf16> to vector<32x128xbf16>
    %c2_70 = arith.constant 2 : index
    %c1_71 = arith.constant 1 : index
    %c0_72 = arith.constant 0 : index
    %c0_73 = arith.constant 0 : index
    %45 = vector.load %arg2[%c2_70, %c1_71, %c0_72, %c0_73] : memref<3x3x128x128xbf16, #tpu.memory_space<vmem>>, vector<1x1x128x128xbf16>
    %46 = vector.shape_cast %45 : vector<1x1x128x128xbf16> to vector<128x128xbf16>
    %cst_74 = arith.constant dense<0.000000e+00> : vector<32x128xf32>
    %47 = tpu.matmul %44, %46, %cst_74 {dimension_numbers = #tpu.dot_dimension_numbers<[1], [0], [0], [1], [0, 0, 1, 1], [], []>} : vector<32x128xbf16>, vector<128x128xbf16>, vector<32x128xf32> -> vector<32x128xf32>
    %48 = arith.addf %42, %47 : vector<32x128xf32>
    %c2_75 = arith.constant 2 : index
    %c0_76 = arith.constant 0 : index
    %c0_77 = arith.constant 0 : index
    %c16_78 = arith.constant 16 : index
    %c0_79 = arith.constant 0 : index
    %49 = vector.load %arg1[%c2_75, %c0_76, %c0_77, %c16_78, %c0_79] : memref<3x1x1x48x128xbf16, #tpu.memory_space<vmem>>, vector<1x1x1x32x128xbf16>
    %50 = vector.shape_cast %49 : vector<1x1x1x32x128xbf16> to vector<32x128xbf16>
    %c2_80 = arith.constant 2 : index
    %c2_81 = arith.constant 2 : index
    %c0_82 = arith.constant 0 : index
    %c0_83 = arith.constant 0 : index
    %51 = vector.load %arg2[%c2_80, %c2_81, %c0_82, %c0_83] : memref<3x3x128x128xbf16, #tpu.memory_space<vmem>>, vector<1x1x128x128xbf16>
    %52 = vector.shape_cast %51 : vector<1x1x128x128xbf16> to vector<128x128xbf16>
    %cst_84 = arith.constant dense<0.000000e+00> : vector<32x128xf32>
    %53 = tpu.matmul %50, %52, %cst_84 {dimension_numbers = #tpu.dot_dimension_numbers<[1], [0], [0], [1], [0, 0, 1, 1], [], []>} : vector<32x128xbf16>, vector<128x128xbf16>, vector<32x128xf32> -> vector<32x128xf32>
    %54 = arith.addf %48, %53 : vector<32x128xf32>
    %c0_85 = arith.constant 0 : index
    %c0_86 = arith.constant 0 : index
    %55 = vector.load %arg3[%c0_85, %c0_86] : memref<1x128xf32, #tpu.memory_space<vmem>>, vector<1x128xf32>
    %56 = vector.broadcast %55 : vector<1x128xf32> to vector<32x128xf32>
    %57 = arith.mulf %54, %56 : vector<32x128xf32>
    %c0_87 = arith.constant 0 : index
    %c0_88 = arith.constant 0 : index
    %58 = vector.load %arg4[%c0_87, %c0_88] : memref<1x128xf32, #tpu.memory_space<vmem>>, vector<1x128xf32>
    %59 = vector.broadcast %58 : vector<1x128xf32> to vector<32x128xf32>
    %60 = arith.addf %57, %59 : vector<32x128xf32>
    %c0_89 = arith.constant 0 : index
    %c0_90 = arith.constant 0 : index
    %61 = vector.load %arg5[%c0_89, %c0_90] : memref<32x64xbf16, #tpu.memory_space<vmem>>, vector<32x64xbf16>
    %c0_91 = arith.constant 0 : index
    %c0_92 = arith.constant 0 : index
    %62 = vector.load %arg6[%c0_91, %c0_92] : memref<64x128xbf16, #tpu.memory_space<vmem>>, vector<64x128xbf16>
    %cst_93 = arith.constant dense<0.000000e+00> : vector<32x128xf32>
    %63 = tpu.matmul %61, %62, %cst_93 {dimension_numbers = #tpu.dot_dimension_numbers<[1], [0], [0], [1], [0, 0, 1, 1], [], []>} : vector<32x64xbf16>, vector<64x128xbf16>, vector<32x128xf32> -> vector<32x128xf32>
    %c0_94 = arith.constant 0 : index
    %c0_95 = arith.constant 0 : index
    %64 = vector.load %arg7[%c0_94, %c0_95] : memref<1x128xf32, #tpu.memory_space<vmem>>, vector<1x128xf32>
    %65 = vector.broadcast %64 : vector<1x128xf32> to vector<32x128xf32>
    %66 = arith.mulf %63, %65 : vector<32x128xf32>
    %c0_96 = arith.constant 0 : index
    %c0_97 = arith.constant 0 : index
    %67 = vector.load %arg8[%c0_96, %c0_97] : memref<1x128xf32, #tpu.memory_space<vmem>>, vector<1x128xf32>
    %68 = vector.broadcast %67 : vector<1x128xf32> to vector<32x128xf32>
    %69 = arith.addf %66, %68 : vector<32x128xf32>
    %70 = arith.addf %60, %69 : vector<32x128xf32>
    %cst_98 = arith.constant 0.000000e+00 : f32
    %71 = vector.broadcast %cst_98 : f32 to vector<32x128xf32>
    %72 = arith.maximumf %70, %71 : vector<32x128xf32>
    %73 = arith.truncf %72 : vector<32x128xf32> to vector<32x128xbf16>
    %c0_99 = arith.constant 0 : index
    %c0_100 = arith.constant 0 : index
    %74 = vector.load %arg9[%c0_99, %c0_100] : memref<32x128xbf16, #tpu.memory_space<vmem>>, vector<32x128xbf16>
    tpu.vector_store %arg9[%c0_99, %c0_100], %73 {strides = array<i32>} : memref<32x128xbf16, #tpu.memory_space<vmem>>, vector<32x128xbf16>,
    return
  }
  func.func @transform_0(%arg0: i32) -> (i32, i32, i32, i32, i32) {
    %c0_i32 = arith.constant 0 : i32
    %c0_i32_0 = arith.constant 0 : i32
    %c0_i32_1 = arith.constant 0 : i32
    %c0_i32_2 = arith.constant 0 : i32
    %c0_i32_3 = arith.constant 0 : i32
    %c0_i32_4 = arith.constant 0 : i32
    return %c0_i32, %c0_i32_0, %c0_i32_1, %c0_i32_2, %c0_i32_3 : i32, i32, i32, i32, i32
  }
  func.func @transform_1(%arg0: i32) -> (i32, i32, i32, i32) {
    %c0_i32 = arith.constant 0 : i32
    %c0_i32_0 = arith.constant 0 : i32
    %c0_i32_1 = arith.constant 0 : i32
    %c0_i32_2 = arith.constant 0 : i32
    return %c0_i32, %c0_i32_0, %c0_i32_1, %arg0 : i32, i32, i32, i32
  }
  func.func @transform_2(%arg0: i32) -> (i32, i32) {
    %c0_i32 = arith.constant 0 : i32
    %c0_i32_0 = arith.constant 0 : i32
    return %c0_i32, %arg0 : i32, i32
  }
  func.func @transform_3(%arg0: i32) -> (i32, i32) {
    %c0_i32 = arith.constant 0 : i32
    %c0_i32_0 = arith.constant 0 : i32
    return %c0_i32, %arg0 : i32, i32
  }
  func.func @transform_4(%arg0: i32) -> (i32, i32) {
    %c0_i32 = arith.constant 0 : i32
    %c0_i32_0 = arith.constant 0 : i32
    %c0_i32_1 = arith.constant 0 : i32
    return %c0_i32, %c0_i32_0 : i32, i32
  }
  func.func @transform_5(%arg0: i32) -> (i32, i32) {
    %c0_i32 = arith.constant 0 : i32
    %c0_i32_0 = arith.constant 0 : i32
    return %c0_i32, %arg0 : i32, i32
  }
  func.func @transform_6(%arg0: i32) -> (i32, i32) {
    %c0_i32 = arith.constant 0 : i32
    %c0_i32_0 = arith.constant 0 : i32
    return %c0_i32, %arg0 : i32, i32
  }
  func.func @transform_7(%arg0: i32) -> (i32, i32) {
    %c0_i32 = arith.constant 0 : i32
    %c0_i32_0 = arith.constant 0 : i32
    return %c0_i32, %arg0 : i32, i32
  }
  func.func @transform_8(%arg0: i32) -> (i32, i32) {
    %c0_i32 = arith.constant 0 : i32
    %c0_i32_0 = arith.constant 0 : i32
    return %c0_i32, %arg0 : i32, i32
  }
}

</mosaic_0001>

<llo_original>
// kernel: _lambda_.2
$region0: #{_lambda_.2}
  #allocation0 [shape = 'u32[]', space=smem, size = 0x4, offset = 0x4, fixed_abs, tag = 'smem constant byte address 0x4 - core index']
  #allocation1 [shape = 'u32[144,128]{1,0:T(1,128)}', space=vmem, size = 0x12000, scoped, tag = 'internal scratch']
  %s0 = inlined_call_operand.vmem [shape: bf16[2,2,2,40,64], index: 0, kind: input, shape index: {}]
  %s1 = inlined_call_operand.vmem [shape: bf16[3,3,64,128], index: 1, kind: input, shape index: {}]
  %s2 = inlined_call_operand.vmem [shape: f32[1,128], index: 2, kind: input, shape index: {}]
  %s3 = inlined_call_operand.vmem [shape: f32[1,128], index: 3, kind: input, shape index: {}]
  %s4 = inlined_call_operand.vmem [shape: bf16[32,128], index: 4, kind: output, shape index: {}]
  %s5 = sld [smem:[#allocation0]]
  $region26: #{_lambda_.2} parent=0
    _
  %s7 = ssub.s32 1, %s5
  %s8 = scalar_select 0, %s7, %s5
  // Predicated region
  $region2: #{_lambda_.2} parent=0 // pred_check
    _
  $region3: #{_lambda_.2} parent=0 // pred_check_branch
    %10 = sbr.rel (0) target = $region5
  $region4: #{_lambda_.2} parent=0 // pred_region
    _
  $region5: #{_lambda_.2} parent=0 // pred_fallthru
    _
  // Predicated region
  $region6: #{_lambda_.2} parent=0 // pred_check
    _
  $region7: #{_lambda_.2} parent=0 // pred_check_branch
    %12 = sbr.rel (0) target = $region9
  $region8: #{_lambda_.2} parent=0 // pred_region
    _
  $region9: #{_lambda_.2} parent=0 // pred_fallthru
    _
  // Predicated region
  $region10: #{_lambda_.2} parent=0 // pred_check
    _
  $region11: #{_lambda_.2} parent=0 // pred_check_branch
    %14 = sbr.rel (0) target = $region13
  $region12: #{_lambda_.2} parent=0 // pred_region
    _
  $region13: #{_lambda_.2} parent=0 // pred_fallthru
    _
  // Predicated region
  $region14: #{_lambda_.2} parent=0 // pred_check
    _
  $region15: #{_lambda_.2} parent=0 // pred_check_branch
    %16 = sbr.rel (0) target = $region17
  $region16: #{_lambda_.2} parent=0 // pred_region
    _
  $region17: #{_lambda_.2} parent=0 // pred_fallthru
    _
  %v18 = vld [vmem:[%s0] sm:$0xf]
  %v19 = vld [vmem:[%s0 + $0x4] sm:$0xf]
  %v20 = vld [vmem:[%s0 + $0x8] sm:$0xf]
  %v21 = vld [vmem:[%s0 + $0xc] sm:$0xf]
  %v22 = vld [vmem:[%s1] sm:$0xf]
  %v23 = vld [vmem:[%s1 + $0x4] sm:$0xf]
  %v24 = vld [vmem:[%s1 + $0x8] sm:$0xf]
  %v25 = vld [vmem:[%s1 + $0xc] sm:$0xf]
  %v26 = vld [vmem:[%s1 + $0x10] sm:$0xf]
  %v27 = vld [vmem:[%s1 + $0x14] sm:$0xf]
  %v28 = vld [vmem:[%s1 + $0x18] sm:$0xf]
  %v29 = vld [vmem:[%s1 + $0x1c] sm:$0xf]
  %s30 = scalar_lea.vmem %s0, 20
  %v31 = vld [vmem:[%s30] sm:$0xf]
  %v32 = vld [vmem:[%s30 + $0x4] sm:$0xf]
  %v33 = vld [vmem:[%s30 + $0x8] sm:$0xf]
  %v34 = vld [vmem:[%s30 + $0xc] sm:$0xf]
  %s35 = scalar_lea.vmem %s1, 32
  %v36 = vld [vmem:[%s35] sm:$0xf]
  %v37 = vld [vmem:[%s35 + $0x4] sm:$0xf]
  %v38 = vld [vmem:[%s35 + $0x8] sm:$0xf]
  %v39 = vld [vmem:[%s35 + $0xc] sm:$0xf]
  %v40 = vld [vmem:[%s35 + $0x10] sm:$0xf]
  %v41 = vld [vmem:[%s35 + $0x14] sm:$0xf]
  %v42 = vld [vmem:[%s35 + $0x18] sm:$0xf]
  %v43 = vld [vmem:[%s35 + $0x1c] sm:$0xf]
  %v48 = vunpack.c.l.b16 %v31
  %v49 = vunpack.c.l.b16 %v32
  %v50 = vunpack.c.l.b16 %v33
  %v51 = vunpack.c.l.b16 %v34
  %v52 = vpack.c.b16 %v49, %v48
  %v53 = vpack.c.b16 %v51, %v50
  %v62 = vunpack.c.l.b16 %v36
  %v63 = vunpack.c.l.b16 %v37
  %v64 = vunpack.c.l.b16 %v38
  %v65 = vunpack.c.l.b16 %v39
  %v66 = vunpack.c.l.b16 %v40
  %v67 = vunpack.c.l.b16 %v41
  %v68 = vunpack.c.l.b16 %v42
  %v69 = vunpack.c.l.b16 %v43
  %v70 = vpack.c.b16 %v63, %v62
  %v71 = vpack.c.b16 %v65, %v64
  %v72 = vpack.c.b16 %v67, %v66
  %v73 = vpack.c.b16 %v69, %v68
  %vm78 = vcmask 523264
  %v80 = vsel %vm78, %v52, 0
  %v83 = vsel %vm78, %v53, 0
  %85 = vmatprep.subr.bf16.mxu0 0
  %86 = vmatpush1.bf16.msra.mxu0 %v70
  %87 = vmatprep.subr.bf16.mxu0 0
  %88 = vmatpush1.bf16.msra.mxu0 %v71
  %89 = vmatprep.subr.bf16.mxu0 0
  %90 = vmatpush1.bf16.msra.mxu0 %v72
  %91 = vmatprep.subr.bf16.mxu0 0
  %92 = vmatpush1.bf16.msra.mxu0 %v73
  %93 = vmatprep.subr.bf16.mxu0 0
  %94 = vmatpush1.bf16.msra.mxu0 0
  %95 = vmatprep.subr.bf16.mxu0 0
  %96 = vmatpush1.bf16.msra.mxu0 0
  %97 = vmatprep.subr.bf16.mxu0 0
  %98 = vmatpush1.bf16.msra.mxu0 0
  %99 = vmatprep.subr.bf16.mxu0 0
  %100 = vmatpush1.bf16.msra.mxu0 0
  %101 = vmatprep.subr.bf16.mxu0 0
  %102 = vmatpush1.bf16.msra.mxu0 0
  %103 = vmatprep.subr.bf16.mxu0 0
  %104 = vmatpush1.bf16.msra.mxu0 0
  %105 = vmatprep.subr.bf16.mxu0 0
  %106 = vmatpush1.bf16.msra.mxu0 0
  %107 = vmatprep.subr.bf16.mxu0 0
  %108 = vmatpush1.bf16.msra.mxu0 0
  %109 = vmatprep.subr.bf16.mxu0 0
  %110 = vmatpush1.bf16.msra.mxu0 0
  %111 = vmatprep.subr.bf16.mxu0 0
  %112 = vmatpush1.bf16.msra.mxu0 0
  %113 = vmatprep.subr.bf16.mxu0 0
  %114 = vmatpush1.bf16.msra.mxu0 0
  %115 = vmatprep.subr.bf16.mxu0 0
  %116 = vmatpush1.bf16.msra.mxu0 0
  %117 = vmatprep.mubr.bf16.mxu0 0
  %118 = vmatmul.mubr.bf16.gmra.mrb[0].mxu0 %v80
  %v119 = vpop.f32.mrb[0].mxu0
  %v120 = vadd.f32 0.0, %v119
  %v121 = vpop.f32.mrb[0].mxu0
  %v122 = vpop.f32.mrb[0].mxu0
  %v123 = vadd.f32 0.0, %v122
  %v124 = vpop.f32.mrb[0].mxu0
  %125 = vmatprep.mubr.bf16.mxu0 0
  %126 = vmatmul.mubr.bf16.gmra.mrb[0].mxu0 %v83
  %v127 = vpop.f32.mrb[0].mxu0
  %v128 = vadd.f32 0.0, %v127
  %v129 = vpop.f32.mrb[0].mxu0
  %v130 = vpop.f32.mrb[0].mxu0
  %v131 = vadd.f32 0.0, %v130
  %v132 = vpop.f32.mrb[0].mxu0
  %133 = vdwg.mxu0
  %v138 = vunpack.c.l.b16 %v18
  %v139 = vunpack.c.l.b16 %v19
  %v140 = vunpack.c.l.b16 %v20
  %v141 = vunpack.c.l.b16 %v21
  %v142 = vpack.c.b16 %v139, %v138
  %v143 = vpack.c.b16 %v141, %v140
  %v152 = vunpack.c.l.b16 %v22
  %v153 = vunpack.c.l.b16 %v23
  %v154 = vunpack.c.l.b16 %v24
  %v155 = vunpack.c.l.b16 %v25
  %v156 = vunpack.c.l.b16 %v26
  %v157 = vunpack.c.l.b16 %v27
  %v158 = vunpack.c.l.b16 %v28
  %v159 = vunpack.c.l.b16 %v29
  %v160 = vpack.c.b16 %v153, %v152
  %v161 = vpack.c.b16 %v155, %v154
  %v162 = vpack.c.b16 %v157, %v156
  %v163 = vpack.c.b16 %v159, %v158
  %v169 = vsel %vm78, %v142, 0
  %v172 = vsel %vm78, %v143, 0
  %174 = vmatprep.subr.bf16.mxu0 0
  %175 = vmatpush1.bf16.msra.mxu0 %v160
  %176 = vmatprep.subr.bf16.mxu0 0
  %177 = vmatpush1.bf16.msra.mxu0 %v161
  %178 = vmatprep.subr.bf16.mxu0 0
  %179 = vmatpush1.bf16.msra.mxu0 %v162
  %180 = vmatprep.subr.bf16.mxu0 0
  %181 = vmatpush1.bf16.msra.mxu0 %v163
  %182 = vmatprep.subr.bf16.mxu0 0
  %183 = vmatpush1.bf16.msra.mxu0 0
  %184 = vmatprep.subr.bf16.mxu0 0
  %185 = vmatpush1.bf16.msra.mxu0 0
  %186 = vmatprep.subr.bf16.mxu0 0
  %187 = vmatpush1.bf16.msra.mxu0 0
  %188 = vmatprep.subr.bf16.mxu0 0
  %189 = vmatpush1.bf16.msra.mxu0 0
  %190 = vmatprep.subr.bf16.mxu0 0
  %191 = vmatpush1.bf16.msra.mxu0 0
  %192 = vmatprep.subr.bf16.mxu0 0
  %193 = vmatpush1.bf16.msra.mxu0 0
  %194 = vmatprep.subr.bf16.mxu0 0
  %195 = vmatpush1.bf16.msra.mxu0 0
  %196 = vmatprep.subr.bf16.mxu0 0
  %197 = vmatpush1.bf16.msra.mxu0 0
  %198 = vmatprep.subr.bf16.mxu0 0
  %199 = vmatpush1.bf16.msra.mxu0 0
  %200 = vmatprep.subr.bf16.mxu0 0
  %201 = vmatpush1.bf16.msra.mxu0 0
  %202 = vmatprep.subr.bf16.mxu0 0
  %203 = vmatpush1.bf16.msra.mxu0 0
  %204 = vmatprep.subr.bf16.mxu0 0
  %205 = vmatpush1.bf16.msra.mxu0 0
  %206 = vmatprep.mubr.bf16.mxu0 0
  %207 = vmatmul.mubr.bf16.gmra.mrb[0].mxu0 %v169
  %v208 = vpop.f32.mrb[0].mxu0
  %v209 = vadd.f32 %v120, %v208
  %v210 = vpop.f32.mrb[0].mxu0
  %v211 = vpop.f32.mrb[0].mxu0
  %v212 = vadd.f32 %v123, %v211
  %v213 = vpop.f32.mrb[0].mxu0
  %214 = vmatprep.mubr.bf16.mxu0 0
  %215 = vmatmul.mubr.bf16.gmra.mrb[0].mxu0 %v172
  %v216 = vpop.f32.mrb[0].mxu0
  %v217 = vadd.f32 %v128, %v216
  %v218 = vpop.f32.mrb[0].mxu0
  %v219 = vpop.f32.mrb[0].mxu0
  %v220 = vadd.f32 %v131, %v219
  %v221 = vpop.f32.mrb[0].mxu0
  %222 = vdwg.mxu0
  %s223 = scalar_lea.vmem %s0, 80
  %v224 = vld [vmem:[%s223] sm:$0xf]
  %v225 = vld [vmem:[%s223 + $0x4] sm:$0xf]
  %v226 = vld [vmem:[%s223 + $0x8] sm:$0xf]
  %v227 = vld [vmem:[%s223 + $0xc] sm:$0xf]
  %s228 = scalar_lea.vmem %s1, 64
  %v229 = vld [vmem:[%s228] sm:$0xf]
  %v230 = vld [vmem:[%s228 + $0x4] sm:$0xf]
  %v231 = vld [vmem:[%s228 + $0x8] sm:$0xf]
  %v232 = vld [vmem:[%s228 + $0xc] sm:$0xf]
  %v233 = vld [vmem:[%s228 + $0x10] sm:$0xf]
  %v234 = vld [vmem:[%s228 + $0x14] sm:$0xf]
  %v235 = vld [vmem:[%s228 + $0x18] sm:$0xf]
  %v236 = vld [vmem:[%s228 + $0x1c] sm:$0xf]
  %v241 = vunpack.c.l.b16 %v224
  %v242 = vunpack.c.l.b16 %v225
  %v243 = vunpack.c.l.b16 %v226
  %v244 = vunpack.c.l.b16 %v227
  %v245 = vpack.c.b16 %v242, %v241
  %v246 = vpack.c.b16 %v244, %v243
  %v255 = vunpack.c.l.b16 %v229
  %v256 = vunpack.c.l.b16 %v230
  %v257 = vunpack.c.l.b16 %v231
  %v258 = vunpack.c.l.b16 %v232
  %v259 = vunpack.c.l.b16 %v233
  %v260 = vunpack.c.l.b16 %v234
  %v261 = vunpack.c.l.b16 %v235
  %v262 = vunpack.c.l.b16 %v236
  %v263 = vpack.c.b16 %v256, %v255
  %v264 = vpack.c.b16 %v258, %v257
  %v265 = vpack.c.b16 %v260, %v259
  %v266 = vpack.c.b16 %v262, %v261
  %v272 = vsel %vm78, %v245, 0
  %v275 = vsel %vm78, %v246, 0
  %277 = vmatprep.subr.bf16.mxu0 0
  %278 = vmatpush1.bf16.msra.mxu0 %v263
  %279 = vmatprep.subr.bf16.mxu0 0
  %280 = vmatpush1.bf16.msra.mxu0 %v264
  %281 = vmatprep.subr.bf16.mxu0 0
  %282 = vmatpush1.bf16.msra.mxu0 %v265
  %283 = vmatprep.subr.bf16.mxu0 0
  %284 = vmatpush1.bf16.msra.mxu0 %v266
  %285 = vmatprep.subr.bf16.mxu0 0
  %286 = vmatpush1.bf16.msra.mxu0 0
  %287 = vmatprep.subr.bf16.mxu0 0
  %288 = vmatpush1.bf16.msra.mxu0 0
  %289 = vmatprep.subr.bf16.mxu0 0
  %290 = vmatpush1.bf16.msra.mxu0 0
  %291 = vmatprep.subr.bf16.mxu0 0
  %292 = vmatpush1.bf16.msra.mxu0 0
  %293 = vmatprep.subr.bf16.mxu0 0
  %294 = vmatpush1.bf16.msra.mxu0 0
  %295 = vmatprep.subr.bf16.mxu0 0
  %296 = vmatpush1.bf16.msra.mxu0 0
  %297 = vmatprep.subr.bf16.mxu0 0
  %298 = vmatpush1.bf16.msra.mxu0 0
  %299 = vmatprep.subr.bf16.mxu0 0
  %300 = vmatpush1.bf16.msra.mxu0 0
  %301 = vmatprep.subr.bf16.mxu0 0
  %302 = vmatpush1.bf16.msra.mxu0 0
  %303 = vmatprep.subr.bf16.mxu0 0
  %304 = vmatpush1.bf16.msra.mxu0 0
  %305 = vmatprep.subr.bf16.mxu0 0
  %306 = vmatpush1.bf16.msra.mxu0 0
  %307 = vmatprep.subr.bf16.mxu0 0
  %308 = vmatpush1.bf16.msra.mxu0 0
  %309 = vmatprep.mubr.bf16.mxu0 0
  %310 = vmatmul.mubr.bf16.gmra.mrb[0].mxu0 %v272
  %v311 = vpop.f32.mrb[0].mxu0
  %v312 = vadd.f32 0.0, %v311
  %v313 = vpop.f32.mrb[0].mxu0
  %v314 = vpop.f32.mrb[0].mxu0
  %v315 = vadd.f32 0.0, %v314
  %v316 = vpop.f32.mrb[0].mxu0
  %317 = vmatprep.mubr.bf16.mxu0 0
  %318 = vmatmul.mubr.bf16.gmra.mrb[0].mxu0 %v275
  %v319 = vpop.f32.mrb[0].mxu0
  %v320 = vadd.f32 0.0, %v319
  %v321 = vpop.f32.mrb[0].mxu0
  %v322 = vpop.f32.mrb[0].mxu0
  %v323 = vadd.f32 0.0, %v322
  %v324 = vpop.f32.mrb[0].mxu0
  %325 = vdwg.mxu0
  %v326 = vadd.f32 %v209, %v312
  %v327 = vadd.f32 %v212, %v315
  %v328 = vadd.f32 %v217, %v320
  %v329 = vadd.f32 %v220, %v323
  %s330 = scalar_lea.vmem %s0, 40
  %v331 = vld [vmem:[%s330] sm:$0xf]
  %v332 = vld [vmem:[%s330 + $0x4] sm:$0xf]
  %v333 = vld [vmem:[%s330 + $0x8] sm:$0xf]
  %v334 = vld [vmem:[%s330 + $0xc] sm:$0xf]
  %s335 = scalar_lea.vmem %s1, 96
  %v336 = vld [vmem:[%s335] sm:$0xf]
  %v337 = vld [vmem:[%s335 + $0x4] sm:$0xf]
  %v338 = vld [vmem:[%s335 + $0x8] sm:$0xf]
  %v339 = vld [vmem:[%s335 + $0xc] sm:$0xf]
  %v340 = vld [vmem:[%s335 + $0x10] sm:$0xf]
  %v341 = vld [vmem:[%s335 + $0x14] sm:$0xf]
  %v342 = vld [vmem:[%s335 + $0x18] sm:$0xf]
  %v343 = vld [vmem:[%s335 + $0x1c] sm:$0xf]
  %v348 = vunpack.c.l.b16 %v331
  %v349 = vunpack.c.l.b16 %v332
  %v350 = vunpack.c.l.b16 %v333
  %v351 = vunpack.c.l.b16 %v334
  %v352 = vpack.c.b16 %v349, %v348
  %v353 = vpack.c.b16 %v351, %v350
  %v362 = vunpack.c.l.b16 %v336
  %v363 = vunpack.c.l.b16 %v337
  %v364 = vunpack.c.l.b16 %v338
  %v365 = vunpack.c.l.b16 %v339
  %v366 = vunpack.c.l.b16 %v340
  %v367 = vunpack.c.l.b16 %v341
  %v368 = vunpack.c.l.b16 %v342
  %v369 = vunpack.c.l.b16 %v343
  %v370 = vpack.c.b16 %v363, %v362
  %v371 = vpack.c.b16 %v365, %v364
  %v372 = vpack.c.b16 %v367, %v366
  %v373 = vpack.c.b16 %v369, %v368
  %v379 = vsel %vm78, %v352, 0
  %v382 = vsel %vm78, %v353, 0
  %384 = vmatprep.subr.bf16.mxu0 0
  %385 = vmatpush1.bf16.msra.mxu0 %v370
  %386 = vmatprep.subr.bf16.mxu0 0
  %387 = vmatpush1.bf16.msra.mxu0 %v371
  %388 = vmatprep.subr.bf16.mxu0 0
  %389 = vmatpush1.bf16.msra.mxu0 %v372
  %390 = vmatprep.subr.bf16.mxu0 0
  %391 = vmatpush1.bf16.msra.mxu0 %v373
  %392 = vmatprep.subr.bf16.mxu0 0
  %393 = vmatpush1.bf16.msra.mxu0 0
  %394 = vmatprep.subr.bf16.mxu0 0
  %395 = vmatpush1.bf16.msra.mxu0 0
  %396 = vmatprep.subr.bf16.mxu0 0
  %397 = vmatpush1.bf16.msra.mxu0 0
  %398 = vmatprep.subr.bf16.mxu0 0
  %399 = vmatpush1.bf16.msra.mxu0 0
  %400 = vmatprep.subr.bf16.mxu0 0
  %401 = vmatpush1.bf16.msra.mxu0 0
  %402 = vmatprep.subr.bf16.mxu0 0
  %403 = vmatpush1.bf16.msra.mxu0 0
  %404 = vmatprep.subr.bf16.mxu0 0
  %405 = vmatpush1.bf16.msra.mxu0 0
  %406 = vmatprep.subr.bf16.mxu0 0
  %407 = vmatpush1.bf16.msra.mxu0 0
  %408 = vmatprep.subr.bf16.mxu0 0
  %409 = vmatpush1.bf16.msra.mxu0 0
  %410 = vmatprep.subr.bf16.mxu0 0
  %411 = vmatpush1.bf16.msra.mxu0 0
  %412 = vmatprep.subr.bf16.mxu0 0
  %413 = vmatpush1.bf16.msra.mxu0 0
  %414 = vmatprep.subr.bf16.mxu0 0
  %415 = vmatpush1.bf16.msra.mxu0 0
  %416 = vmatprep.mubr.bf16.mxu0 0
  %417 = vmatmul.mubr.bf16.gmra.mrb[0].mxu0 %v379
  %v418 = vpop.f32.mrb[0].mxu0
  %v419 = vadd.f32 0.0, %v418
  %v420 = vpop.f32.mrb[0].mxu0
  %v421 = vpop.f32.mrb[0].mxu0
  %v422 = vadd.f32 0.0, %v421
  %v423 = vpop.f32.mrb[0].mxu0
  %424 = vmatprep.mubr.bf16.mxu0 0
  %425 = vmatmul.mubr.bf16.gmra.mrb[0].mxu0 %v382
  %v426 = vpop.f32.mrb[0].mxu0
  %v427 = vadd.f32 0.0, %v426
  %v428 = vpop.f32.mrb[0].mxu0
  %v429 = vpop.f32.mrb[0].mxu0
  %v430 = vadd.f32 0.0, %v429
  %v431 = vpop.f32.mrb[0].mxu0
  %432 = vdwg.mxu0
  %v433 = vadd.f32 %v326, %v419
  %v434 = vadd.f32 %v327, %v422
  %v435 = vadd.f32 %v328, %v427
  %v436 = vadd.f32 %v329, %v430
  %s437 = scalar_lea.vmem %s0, 60
  %v438 = vld [vmem:[%s437] sm:$0xf]
  %v439 = vld [vmem:[%s437 + $0x4] sm:$0xf]
  %v440 = vld [vmem:[%s437 + $0x8] sm:$0xf]
  %v441 = vld [vmem:[%s437 + $0xc] sm:$0xf]
  %s442 = scalar_lea.vmem %s1, 128
  %v443 = vld [vmem:[%s442] sm:$0xf]
  %v444 = vld [vmem:[%s442 + $0x4] sm:$0xf]
  %v445 = vld [vmem:[%s442 + $0x8] sm:$0xf]
  %v446 = vld [vmem:[%s442 + $0xc] sm:$0xf]
  %v447 = vld [vmem:[%s442 + $0x10] sm:$0xf]
  %v448 = vld [vmem:[%s442 + $0x14] sm:$0xf]
  %v449 = vld [vmem:[%s442 + $0x18] sm:$0xf]
  %v450 = vld [vmem:[%s442 + $0x1c] sm:$0xf]
  %v455 = vunpack.c.l.b16 %v438
  %v456 = vunpack.c.l.b16 %v439
  %v457 = vunpack.c.l.b16 %v440
  %v458 = vunpack.c.l.b16 %v441
  %v459 = vpack.c.b16 %v456, %v455
  %v460 = vpack.c.b16 %v458, %v457
  %v469 = vunpack.c.l.b16 %v443
  %v470 = vunpack.c.l.b16 %v444
  %v471 = vunpack.c.l.b16 %v445
  %v472 = vunpack.c.l.b16 %v446
  %v473 = vunpack.c.l.b16 %v447
  %v474 = vunpack.c.l.b16 %v448
  %v475 = vunpack.c.l.b16 %v449
  %v476 = vunpack.c.l.b16 %v450
  %v477 = vpack.c.b16 %v470, %v469
  %v478 = vpack.c.b16 %v472, %v471
  %v479 = vpack.c.b16 %v474, %v473
  %v480 = vpack.c.b16 %v476, %v475
  %v486 = vsel %vm78, %v459, 0
  %v489 = vsel %vm78, %v460, 0
  %491 = vmatprep.subr.bf16.mxu0 0
  %492 = vmatpush1.bf16.msra.mxu0 %v477
  %493 = vmatprep.subr.bf16.mxu0 0
  %494 = vmatpush1.bf16.msra.mxu0 %v478
  %495 = vmatprep.subr.bf16.mxu0 0
  %496 = vmatpush1.bf16.msra.mxu0 %v479
  %497 = vmatprep.subr.bf16.mxu0 0
  %498 = vmatpush1.bf16.msra.mxu0 %v480
  %499 = vmatprep.subr.bf16.mxu0 0
  %500 = vmatpush1.bf16.msra.mxu0 0
  %501 = vmatprep.subr.bf16.mxu0 0
  %502 = vmatpush1.bf16.msra.mxu0 0
  %503 = vmatprep.subr.bf16.mxu0 0
  %504 = vmatpush1.bf16.msra.mxu0 0
  %505 = vmatprep.subr.bf16.mxu0 0
  %506 = vmatpush1.bf16.msra.mxu0 0
  %507 = vmatprep.subr.bf16.mxu0 0
  %508 = vmatpush1.bf16.msra.mxu0 0
  %509 = vmatprep.subr.bf16.mxu0 0
  %510 = vmatpush1.bf16.msra.mxu0 0
  %511 = vmatprep.subr.bf16.mxu0 0
  %512 = vmatpush1.bf16.msra.mxu0 0
  %513 = vmatprep.subr.bf16.mxu0 0
  %514 = vmatpush1.bf16.msra.mxu0 0
  %515 = vmatprep.subr.bf16.mxu0 0
  %516 = vmatpush1.bf16.msra.mxu0 0
  %517 = vmatprep.subr.bf16.mxu0 0
  %518 = vmatpush1.bf16.msra.mxu0 0
  %519 = vmatprep.subr.bf16.mxu0 0
  %520 = vmatpush1.bf16.msra.mxu0 0
  %521 = vmatprep.subr.bf16.mxu0 0
  %522 = vmatpush1.bf16.msra.mxu0 0
  %523 = vmatprep.mubr.bf16.mxu0 0
  %524 = vmatmul.mubr.bf16.gmra.mrb[0].mxu0 %v486
  %v525 = vpop.f32.mrb[0].mxu0
  %v526 = vadd.f32 0.0, %v525
  %v527 = vpop.f32.mrb[0].mxu0
  %v528 = vpop.f32.mrb[0].mxu0
  %v529 = vadd.f32 0.0, %v528
  %v530 = vpop.f32.mrb[0].mxu0
  %531 = vmatprep.mubr.bf16.mxu0 0
  %532 = vmatmul.mubr.bf16.gmra.mrb[0].mxu0 %v489
  %v533 = vpop.f32.mrb[0].mxu0
  %v534 = vadd.f32 0.0, %v533
  %v535 = vpop.f32.mrb[0].mxu0
  %v536 = vpop.f32.mrb[0].mxu0
  %v537 = vadd.f32 0.0, %v536
  %v538 = vpop.f32.mrb[0].mxu0
  %539 = vdwg.mxu0
  %v540 = vadd.f32 %v433, %v526
  %v541 = vadd.f32 %v434, %v529
  %v542 = vadd.f32 %v435, %v534
  %v543 = vadd.f32 %v436, %v537
  %s544 = scalar_lea.vmem %s0, 120
  %v545 = vld [vmem:[%s544] sm:$0xf]
  %v546 = vld [vmem:[%s544 + $0x4] sm:$0xf]
  %v547 = vld [vmem:[%s544 + $0x8] sm:$0xf]
  %v548 = vld [vmem:[%s544 + $0xc] sm:$0xf]
  %s549 = scalar_lea.vmem %s1, 160
  %v550 = vld [vmem:[%s549] sm:$0xf]
  %v551 = vld [vmem:[%s549 + $0x4] sm:$0xf]
  %v552 = vld [vmem:[%s549 + $0x8] sm:$0xf]
  %v553 = vld [vmem:[%s549 + $0xc] sm:$0xf]
  %v554 = vld [vmem:[%s549 + $0x10] sm:$0xf]
  %v555 = vld [vmem:[%s549 + $0x14] sm:$0xf]
  %v556 = vld [vmem:[%s549 + $0x18] sm:$0xf]
  %v557 = vld [vmem:[%s549 + $0x1c] sm:$0xf]
  %v562 = vunpack.c.l.b16 %v545
  %v563 = vunpack.c.l.b16 %v546
  %v564 = vunpack.c.l.b16 %v547
  %v565 = vunpack.c.l.b16 %v548
  %v566 = vpack.c.b16 %v563, %v562
  %v567 = vpack.c.b16 %v565, %v564
  %v576 = vunpack.c.l.b16 %v550
  %v577 = vunpack.c.l.b16 %v551
  %v578 = vunpack.c.l.b16 %v552
  %v579 = vunpack.c.l.b16 %v553
  %v580 = vunpack.c.l.b16 %v554
  %v581 = vunpack.c.l.b16 %v555
  %v582 = vunpack.c.l.b16 %v556
  %v583 = vunpack.c.l.b16 %v557
  %v584 = vpack.c.b16 %v577, %v576
  %v585 = vpack.c.b16 %v579, %v578
  %v586 = vpack.c.b16 %v581, %v580
  %v587 = vpack.c.b16 %v583, %v582
  %v593 = vsel %vm78, %v566, 0
  %v596 = vsel %vm78, %v567, 0
  %598 = vmatprep.subr.bf16.mxu0 0
  %599 = vmatpush1.bf16.msra.mxu0 %v584
  %600 = vmatprep.subr.bf16.mxu0 0
  %601 = vmatpush1.bf16.msra.mxu0 %v585
  %602 = vmatprep.subr.bf16.mxu0 0
  %603 = vmatpush1.bf16.msra.mxu0 %v586
  %604 = vmatprep.subr.bf16.mxu0 0
  %605 = vmatpush1.bf16.msra.mxu0 %v587
  %606 = vmatprep.subr.bf16.mxu0 0
  %607 = vmatpush1.bf16.msra.mxu0 0
  %608 = vmatprep.subr.bf16.mxu0 0
  %609 = vmatpush1.bf16.msra.mxu0 0
  %610 = vmatprep.subr.bf16.mxu0 0
  %611 = vmatpush1.bf16.msra.mxu0 0
  %612 = vmatprep.subr.bf16.mxu0 0
  %613 = vmatpush1.bf16.msra.mxu0 0
  %614 = vmatprep.subr.bf16.mxu0 0
  %615 = vmatpush1.bf16.msra.mxu0 0
  %616 = vmatprep.subr.bf16.mxu0 0
  %617 = vmatpush1.bf16.msra.mxu0 0
  %618 = vmatprep.subr.bf16.mxu0 0
  %619 = vmatpush1.bf16.msra.mxu0 0
  %620 = vmatprep.subr.bf16.mxu0 0
  %621 = vmatpush1.bf16.msra.mxu0 0
  %622 = vmatprep.subr.bf16.mxu0 0
  %623 = vmatpush1.bf16.msra.mxu0 0
  %624 = vmatprep.subr.bf16.mxu0 0
  %625 = vmatpush1.bf16.msra.mxu0 0
  %626 = vmatprep.subr.bf16.mxu0 0
  %627 = vmatpush1.bf16.msra.mxu0 0
  %628 = vmatprep.subr.bf16.mxu0 0
  %629 = vmatpush1.bf16.msra.mxu0 0
  %630 = vmatprep.mubr.bf16.mxu0 0
  %631 = vmatmul.mubr.bf16.gmra.mrb[0].mxu0 %v593
  %v632 = vpop.f32.mrb[0].mxu0
  %v633 = vadd.f32 0.0, %v632
  %v634 = vpop.f32.mrb[0].mxu0
  %v635 = vpop.f32.mrb[0].mxu0
  %v636 = vadd.f32 0.0, %v635
  %v637 = vpop.f32.mrb[0].mxu0
  %638 = vmatprep.mubr.bf16.mxu0 0
  %639 = vmatmul.mubr.bf16.gmra.mrb[0].mxu0 %v596
  %v640 = vpop.f32.mrb[0].mxu0
  %v641 = vadd.f32 0.0, %v640
  %v642 = vpop.f32.mrb[0].mxu0
  %v643 = vpop.f32.mrb[0].mxu0
  %v644 = vadd.f32 0.0, %v643
  %v645 = vpop.f32.mrb[0].mxu0
  %646 = vdwg.mxu0
  %v647 = vadd.f32 %v540, %v633
  %v648 = vadd.f32 %v541, %v636
  %v649 = vadd.f32 %v542, %v641
  %v650 = vadd.f32 %v543, %v644
  %v651 = vld [vmem:[%s0 + $0x4] sm:$0xf]
  %v652 = vld [vmem:[%s0 + $0x8] sm:$0xf]
  %v653 = vld [vmem:[%s0 + $0xc] sm:$0xf]
  %v654 = vld [vmem:[%s0 + $0x10] sm:$0xf]
  %s655 = scalar_lea.vmem %s1, 192
  %v656 = vld [vmem:[%s655] sm:$0xf]
  %v657 = vld [vmem:[%s655 + $0x4] sm:$0xf]
  %v658 = vld [vmem:[%s655 + $0x8] sm:$0xf]
  %v659 = vld [vmem:[%s655 + $0xc] sm:$0xf]
  %v660 = vld [vmem:[%s655 + $0x10] sm:$0xf]
  %v661 = vld [vmem:[%s655 + $0x14] sm:$0xf]
  %v662 = vld [vmem:[%s655 + $0x18] sm:$0xf]
  %v663 = vld [vmem:[%s655 + $0x1c] sm:$0xf]
  %v668 = vunpack.c.l.b16 %v651
  %v669 = vunpack.c.l.b16 %v652
  %v670 = vunpack.c.l.b16 %v653
  %v671 = vunpack.c.l.b16 %v654
  %v672 = vpack.c.b16 %v669, %v668
  %v673 = vpack.c.b16 %v671, %v670
  %v682 = vunpack.c.l.b16 %v656
  %v683 = vunpack.c.l.b16 %v657
  %v684 = vunpack.c.l.b16 %v658
  %v685 = vunpack.c.l.b16 %v659
  %v686 = vunpack.c.l.b16 %v660
  %v687 = vunpack.c.l.b16 %v661
  %v688 = vunpack.c.l.b16 %v662
  %v689 = vunpack.c.l.b16 %v663
  %v690 = vpack.c.b16 %v683, %v682
  %v691 = vpack.c.b16 %v685, %v684
  %v692 = vpack.c.b16 %v687, %v686
  %v693 = vpack.c.b16 %v689, %v688
  %v699 = vsel %vm78, %v672, 0
  %v702 = vsel %vm78, %v673, 0
  %704 = vmatprep.subr.bf16.mxu0 0
  %705 = vmatpush1.bf16.msra.mxu0 %v690
  %706 = vmatprep.subr.bf16.mxu0 0
  %707 = vmatpush1.bf16.msra.mxu0 %v691
  %708 = vmatprep.subr.bf16.mxu0 0
  %709 = vmatpush1.bf16.msra.mxu0 %v692
  %710 = vmatprep.subr.bf16.mxu0 0
  %711 = vmatpush1.bf16.msra.mxu0 %v693
  %712 = vmatprep.subr.bf16.mxu0 0
  %713 = vmatpush1.bf16.msra.mxu0 0
  %714 = vmatprep.subr.bf16.mxu0 0
  %715 = vmatpush1.bf16.msra.mxu0 0
  %716 = vmatprep.subr.bf16.mxu0 0
  %717 = vmatpush1.bf16.msra.mxu0 0
  %718 = vmatprep.subr.bf16.mxu0 0
  %719 = vmatpush1.bf16.msra.mxu0 0
  %720 = vmatprep.subr.bf16.mxu0 0
  %721 = vmatpush1.bf16.msra.mxu0 0
  %722 = vmatprep.subr.bf16.mxu0 0
  %723 = vmatpush1.bf16.msra.mxu0 0
  %724 = vmatprep.subr.bf16.mxu0 0
  %725 = vmatpush1.bf16.msra.mxu0 0
  %726 = vmatprep.subr.bf16.mxu0 0
  %727 = vmatpush1.bf16.msra.mxu0 0
  %728 = vmatprep.subr.bf16.mxu0 0
  %729 = vmatpush1.bf16.msra.mxu0 0
  %730 = vmatprep.subr.bf16.mxu0 0
  %731 = vmatpush1.bf16.msra.mxu0 0
  %732 = vmatprep.subr.bf16.mxu0 0
  %733 = vmatpush1.bf16.msra.mxu0 0
  %734 = vmatprep.subr.bf16.mxu0 0
  %735 = vmatpush1.bf16.msra.mxu0 0
  %736 = vmatprep.mubr.bf16.mxu0 0
  %737 = vmatmul.mubr.bf16.gmra.mrb[0].mxu0 %v699
  %v738 = vpop.f32.mrb[0].mxu0
  %v739 = vadd.f32 0.0, %v738
  %v740 = vpop.f32.mrb[0].mxu0
  %v741 = vpop.f32.mrb[0].mxu0
  %v742 = vadd.f32 0.0, %v741
  %v743 = vpop.f32.mrb[0].mxu0
  %744 = vmatprep.mubr.bf16.mxu0 0
  %745 = vmatmul.mubr.bf16.gmra.mrb[0].mxu0 %v702
  %v746 = vpop.f32.mrb[0].mxu0
  %v747 = vadd.f32 0.0, %v746
  %v748 = vpop.f32.mrb[0].mxu0
  %v749 = vpop.f32.mrb[0].mxu0
  %v750 = vadd.f32 0.0, %v749
  %v751 = vpop.f32.mrb[0].mxu0
  %752 = vdwg.mxu0
  %v753 = vadd.f32 %v647, %v739
  %v754 = vadd.f32 %v648, %v742
  %v755 = vadd.f32 %v649, %v747
  %v756 = vadd.f32 %v650, %v750
  %v757 = vld [vmem:[%s30 + $0x4] sm:$0xf]
  %v758 = vld [vmem:[%s30 + $0x8] sm:$0xf]
  %v759 = vld [vmem:[%s30 + $0xc] sm:$0xf]
  %v760 = vld [vmem:[%s30 + $0x10] sm:$0xf]
  %s761 = scalar_lea.vmem %s1, 224
  %v762 = vld [vmem:[%s761] sm:$0xf]
  %v763 = vld [vmem:[%s761 + $0x4] sm:$0xf]
  %v764 = vld [vmem:[%s761 + $0x8] sm:$0xf]
  %v765 = vld [vmem:[%s761 + $0xc] sm:$0xf]
  %v766 = vld [vmem:[%s761 + $0x10] sm:$0xf]
  %v767 = vld [vmem:[%s761 + $0x14] sm:$0xf]
  %v768 = vld [vmem:[%s761 + $0x18] sm:$0xf]
  %v769 = vld [vmem:[%s761 + $0x1c] sm:$0xf]
  %v774 = vunpack.c.l.b16 %v757
  %v775 = vunpack.c.l.b16 %v758
  %v776 = vunpack.c.l.b16 %v759
  %v777 = vunpack.c.l.b16 %v760
  %v778 = vpack.c.b16 %v775, %v774
  %v779 = vpack.c.b16 %v777, %v776
  %v788 = vunpack.c.l.b16 %v762
  %v789 = vunpack.c.l.b16 %v763
  %v790 = vunpack.c.l.b16 %v764
  %v791 = vunpack.c.l.b16 %v765
  %v792 = vunpack.c.l.b16 %v766
  %v793 = vunpack.c.l.b16 %v767
  %v794 = vunpack.c.l.b16 %v768
  %v795 = vunpack.c.l.b16 %v769
  %v796 = vpack.c.b16 %v789, %v788
  %v797 = vpack.c.b16 %v791, %v790
  %v798 = vpack.c.b16 %v793, %v792
  %v799 = vpack.c.b16 %v795, %v794
  %v805 = vsel %vm78, %v778, 0
  %v808 = vsel %vm78, %v779, 0
  %810 = vmatprep.subr.bf16.mxu0 0
  %811 = vmatpush1.bf16.msra.mxu0 %v796
  %812 = vmatprep.subr.bf16.mxu0 0
  %813 = vmatpush1.bf16.msra.mxu0 %v797
  %814 = vmatprep.subr.bf16.mxu0 0
  %815 = vmatpush1.bf16.msra.mxu0 %v798
  %816 = vmatprep.subr.bf16.mxu0 0
  %817 = vmatpush1.bf16.msra.mxu0 %v799
  %818 = vmatprep.subr.bf16.mxu0 0
  %819 = vmatpush1.bf16.msra.mxu0 0
  %820 = vmatprep.subr.bf16.mxu0 0
  %821 = vmatpush1.bf16.msra.mxu0 0
  %822 = vmatprep.subr.bf16.mxu0 0
  %823 = vmatpush1.bf16.msra.mxu0 0
  %824 = vmatprep.subr.bf16.mxu0 0
  %825 = vmatpush1.bf16.msra.mxu0 0
  %826 = vmatprep.subr.bf16.mxu0 0
  %827 = vmatpush1.bf16.msra.mxu0 0
  %828 = vmatprep.subr.bf16.mxu0 0
  %829 = vmatpush1.bf16.msra.mxu0 0
  %830 = vmatprep.subr.bf16.mxu0 0
  %831 = vmatpush1.bf16.msra.mxu0 0
  %832 = vmatprep.subr.bf16.mxu0 0
  %833 = vmatpush1.bf16.msra.mxu0 0
  %834 = vmatprep.subr.bf16.mxu0 0
  %835 = vmatpush1.bf16.msra.mxu0 0
  %836 = vmatprep.subr.bf16.mxu0 0
  %837 = vmatpush1.bf16.msra.mxu0 0
  %838 = vmatprep.subr.bf16.mxu0 0
  %839 = vmatpush1.bf16.msra.mxu0 0
  %840 = vmatprep.subr.bf16.mxu0 0
  %841 = vmatpush1.bf16.msra.mxu0 0
  %842 = vmatprep.mubr.bf16.mxu0 0
  %843 = vmatmul.mubr.bf16.gmra.mrb[0].mxu0 %v805
  %v844 = vpop.f32.mrb[0].mxu0
  %v845 = vadd.f32 0.0, %v844
  %v846 = vpop.f32.mrb[0].mxu0
  %v847 = vpop.f32.mrb[0].mxu0
  %v848 = vadd.f32 0.0, %v847
  %v849 = vpop.f32.mrb[0].mxu0
  %850 = vmatprep.mubr.bf16.mxu0 0
  %851 = vmatmul.mubr.bf16.gmra.mrb[0].mxu0 %v808
  %v852 = vpop.f32.mrb[0].mxu0
  %v853 = vadd.f32 0.0, %v852
  %v854 = vpop.f32.mrb[0].mxu0
  %v855 = vpop.f32.mrb[0].mxu0
  %v856 = vadd.f32 0.0, %v855
  %v857 = vpop.f32.mrb[0].mxu0
  %858 = vdwg.mxu0
  %v859 = vadd.f32 %v753, %v845
  %v860 = vadd.f32 %v754, %v848
  %v861 = vadd.f32 %v755, %v853
  %v862 = vadd.f32 %v756, %v856
  %v863 = vld [vmem:[%s223 + $0x4] sm:$0xf]
  %v864 = vld [vmem:[%s223 + $0x8] sm:$0xf]
  %v865 = vld [vmem:[%s223 + $0xc] sm:$0xf]
  %v866 = vld [vmem:[%s223 + $0x10] sm:$0xf]
  %s867 = scalar_lea.vmem %s1, 256
  %v868 = vld [vmem:[%s867] sm:$0xf]
  %v869 = vld [vmem:[%s867 + $0x4] sm:$0xf]
  %v870 = vld [vmem:[%s867 + $0x8] sm:$0xf]
  %v871 = vld [vmem:[%s867 + $0xc] sm:$0xf]
  %v872 = vld [vmem:[%s867 + $0x10] sm:$0xf]
  %v873 = vld [vmem:[%s867 + $0x14] sm:$0xf]
  %v874 = vld [vmem:[%s867 + $0x18] sm:$0xf]
  %v875 = vld [vmem:[%s867 + $0x1c] sm:$0xf]
  %v880 = vunpack.c.l.b16 %v863
  %v881 = vunpack.c.l.b16 %v864
  %v882 = vunpack.c.l.b16 %v865
  %v883 = vunpack.c.l.b16 %v866
  %v884 = vpack.c.b16 %v881, %v880
  %v885 = vpack.c.b16 %v883, %v882
  %v894 = vunpack.c.l.b16 %v868
  %v895 = vunpack.c.l.b16 %v869
  %v896 = vunpack.c.l.b16 %v870
  %v897 = vunpack.c.l.b16 %v871
  %v898 = vunpack.c.l.b16 %v872
  %v899 = vunpack.c.l.b16 %v873
  %v900 = vunpack.c.l.b16 %v874
  %v901 = vunpack.c.l.b16 %v875
  %v902 = vpack.c.b16 %v895, %v894
  %v903 = vpack.c.b16 %v897, %v896
  %v904 = vpack.c.b16 %v899, %v898
  %v905 = vpack.c.b16 %v901, %v900
  %v911 = vsel %vm78, %v884, 0
  %v914 = vsel %vm78, %v885, 0
  %916 = vmatprep.subr.bf16.mxu0 0
  %917 = vmatpush1.bf16.msra.mxu0 %v902
  %918 = vmatprep.subr.bf16.mxu0 0
  %919 = vmatpush1.bf16.msra.mxu0 %v903
  %920 = vmatprep.subr.bf16.mxu0 0
  %921 = vmatpush1.bf16.msra.mxu0 %v904
  %922 = vmatprep.subr.bf16.mxu0 0
  %923 = vmatpush1.bf16.msra.mxu0 %v905
  %924 = vmatprep.subr.bf16.mxu0 0
  %925 = vmatpush1.bf16.msra.mxu0 0
  %926 = vmatprep.subr.bf16.mxu0 0
  %927 = vmatpush1.bf16.msra.mxu0 0
  %928 = vmatprep.subr.bf16.mxu0 0
  %929 = vmatpush1.bf16.msra.mxu0 0
  %930 = vmatprep.subr.bf16.mxu0 0
  %931 = vmatpush1.bf16.msra.mxu0 0
  %932 = vmatprep.subr.bf16.mxu0 0
  %933 = vmatpush1.bf16.msra.mxu0 0
  %934 = vmatprep.subr.bf16.mxu0 0
  %935 = vmatpush1.bf16.msra.mxu0 0
  %936 = vmatprep.subr.bf16.mxu0 0
  %937 = vmatpush1.bf16.msra.mxu0 0
  %938 = vmatprep.subr.bf16.mxu0 0
  %939 = vmatpush1.bf16.msra.mxu0 0
  %940 = vmatprep.subr.bf16.mxu0 0
  %941 = vmatpush1.bf16.msra.mxu0 0
  %942 = vmatprep.subr.bf16.mxu0 0
  %943 = vmatpush1.bf16.msra.mxu0 0
  %944 = vmatprep.subr.bf16.mxu0 0
  %945 = vmatpush1.bf16.msra.mxu0 0
  %946 = vmatprep.subr.bf16.mxu0 0
  %947 = vmatpush1.bf16.msra.mxu0 0
  %948 = vmatprep.mubr.bf16.mxu0 0
  %949 = vmatmul.mubr.bf16.gmra.mrb[0].mxu0 %v911
  %v950 = vpop.f32.mrb[0].mxu0
  %v951 = vadd.f32 0.0, %v950
  %v952 = vpop.f32.mrb[0].mxu0
  %v953 = vpop.f32.mrb[0].mxu0
  %v954 = vadd.f32 0.0, %v953
  %v955 = vpop.f32.mrb[0].mxu0
  %956 = vmatprep.mubr.bf16.mxu0 0
  %957 = vmatmul.mubr.bf16.gmra.mrb[0].mxu0 %v914
  %v958 = vpop.f32.mrb[0].mxu0
  %v959 = vadd.f32 0.0, %v958
  %v960 = vpop.f32.mrb[0].mxu0
  %v961 = vpop.f32.mrb[0].mxu0
  %v962 = vadd.f32 0.0, %v961
  %v963 = vpop.f32.mrb[0].mxu0
  %964 = vdwg.mxu0
  %v965 = vadd.f32 %v859, %v951
  %v966 = vadd.f32 %v860, %v954
  %v967 = vadd.f32 %v861, %v959
  %v968 = vadd.f32 %v862, %v962
  %v969 = vld [vmem:[%s2] sm:$0x1]
  %v971 = vlaneseq
  %v972 = vshrl.u32 %v971, 7
  %v973 = vsub.s32 0, %v972
  %v974 = vrot.slane %v969, %v973
  %v976 = vmul.f32 %v965, %v974
  %v977 = vmul.f32 %v966, %v974
  %v978 = vmul.f32 %v967, %v974
  %v979 = vmul.f32 %v968, %v974
  %v980 = vld [vmem:[%s3] sm:$0x1]
  %v982 = vlaneseq
  %v983 = vshrl.u32 %v982, 7
  %v984 = vsub.s32 0, %v983
  %v985 = vrot.slane %v980, %v984
  %v987 = vadd.f32 %v976, %v985
  %v988 = vadd.f32 %v977, %v985
  %v989 = vadd.f32 %v978, %v985
  %v990 = vadd.f32 %v979, %v985
  %v991 = vmax.f32 %v987, 0.0
  %v992 = vmax.f32 %v988, 0.0
  %v993 = vmax.f32 %v989, 0.0
  %v994 = vmax.f32 %v990, 0.0
  %v995 = vpack.c.bf16 %v992, %v991
  %v996 = vpack.c.bf16 %v994, %v993
  %v999 = vunpack.c.l.b16 %v995
  %v1000 = vunpack.c.h.b16 %v995
  %v1001 = vunpack.c.l.b16 %v996
  %v1002 = vunpack.c.h.b16 %v996
  %v1003 = vpack.c.b16 %v999, %v999
  %v1004 = vpack.c.b16 %v1000, %v1000
  %v1005 = vpack.c.b16 %v1001, %v1001
  %v1006 = vpack.c.b16 %v1002, %v1002
  %1011 = vst [vmem:[%s4] sm:$0xf] %v1003
  %1012 = vst [vmem:[%s4 + $0x4] sm:$0xf] %v1004
  %1013 = vst [vmem:[%s4 + $0x8] sm:$0xf] %v1005
  %1014 = vst [vmem:[%s4 + $0xc] sm:$0xf] %v1006
  // Predicated region
  $region18: #{_lambda_.2} parent=0 // pred_check
    _
  $region19: #{_lambda_.2} parent=0 // pred_check_branch
    %1016 = sbr.rel (0) target = $region21
  $region20: #{_lambda_.2} parent=0 // pred_region
    _
  $region21: #{_lambda_.2} parent=0 // pred_fallthru
    _
  // Predicated region
  $region22: #{_lambda_.2} parent=0 // pred_check
    _
  $region23: #{_lambda_.2} parent=0 // pred_check_branch
    %1018 = sbr.rel (0) target = $region25
  $region24: #{_lambda_.2} parent=0 // pred_region
    _
  $region25: #{_lambda_.2} parent=0 // pred_fallthru
    _

// kernel: _lambda_.3
$region0: #{_lambda_.3}
  #allocation0 [shape = 'u32[]', space=smem, size = 0x4, offset = 0x4, fixed_abs, tag = 'smem constant byte address 0x4 - core index']
  #allocation1 [shape = 'u32[144,128]{1,0:T(1,128)}', space=vmem, size = 0x12000, scoped, tag = 'internal scratch']
  %s0 = inlined_call_operand.vmem [shape: bf16[3,1,1,48,128], index: 0, kind: input, shape index: {}]
  %s1 = inlined_call_operand.vmem [shape: bf16[3,3,128,128], index: 1, kind: input, shape index: {}]
  %s2 = inlined_call_operand.vmem [shape: f32[1,128], index: 2, kind: input, shape index: {}]
  %s3 = inlined_call_operand.vmem [shape: f32[1,128], index: 3, kind: input, shape index: {}]
  %s4 = inlined_call_operand.vmem [shape: bf16[32,64], index: 4, kind: input, shape index: {}]
  %s5 = inlined_call_operand.vmem [shape: bf16[64,128], index: 5, kind: input, shape index: {}]
  %s6 = inlined_call_operand.vmem [shape: f32[1,128], index: 6, kind: input, shape index: {}]
  %s7 = inlined_call_operand.vmem [shape: f32[1,128], index: 7, kind: input, shape index: {}]
  %s8 = inlined_call_operand.vmem [shape: bf16[32,128], index: 8, kind: output, shape index: {}]
  %s9 = sld [smem:[#allocation0]]
  $region42: #{_lambda_.3} parent=0
    _
  %s11 = ssub.s32 1, %s9
  %s12 = scalar_select 0, %s11, %s9
  // Predicated region
  $region2: #{_lambda_.3} parent=0 // pred_check
    _
  $region3: #{_lambda_.3} parent=0 // pred_check_branch
    %14 = sbr.rel (0) target = $region5
  $region4: #{_lambda_.3} parent=0 // pred_region
    _
  $region5: #{_lambda_.3} parent=0 // pred_fallthru
    _
  // Predicated region
  $region6: #{_lambda_.3} parent=0 // pred_check
    _
  $region7: #{_lambda_.3} parent=0 // pred_check_branch
    %16 = sbr.rel (0) target = $region9
  $region8: #{_lambda_.3} parent=0 // pred_region
    _
  $region9: #{_lambda_.3} parent=0 // pred_fallthru
    _
  // Predicated region
  $region10: #{_lambda_.3} parent=0 // pred_check
    _
  $region11: #{_lambda_.3} parent=0 // pred_check_branch
    %18 = sbr.rel (0) target = $region13
  $region12: #{_lambda_.3} parent=0 // pred_region
    _
  $region13: #{_lambda_.3} parent=0 // pred_fallthru
    _
  // Predicated region
  $region14: #{_lambda_.3} parent=0 // pred_check
    _
  $region15: #{_lambda_.3} parent=0 // pred_check_branch
    %20 = sbr.rel (0) target = $region17
  $region16: #{_lambda_.3} parent=0 // pred_region
    _
  $region17: #{_lambda_.3} parent=0 // pred_fallthru
    _
  // Predicated region
  $region18: #{_lambda_.3} parent=0 // pred_check
    _
  $region19: #{_lambda_.3} parent=0 // pred_check_branch
    %22 = sbr.rel (0) target = $region21
  $region20: #{_lambda_.3} parent=0 // pred_region
    _
  $region21: #{_lambda_.3} parent=0 // pred_fallthru
    _
  // Predicated region
  $region22: #{_lambda_.3} parent=0 // pred_check
    _
  $region23: #{_lambda_.3} parent=0 // pred_check_branch
    %24 = sbr.rel (0) target = $region25
  $region24: #{_lambda_.3} parent=0 // pred_region
    _
  $region25: #{_lambda_.3} parent=0 // pred_fallthru
    _
  // Predicated region
  $region26: #{_lambda_.3} parent=0 // pred_check
    _
  $region27: #{_lambda_.3} parent=0 // pred_check_branch
    %26 = sbr.rel (0) target = $region29
  $region28: #{_lambda_.3} parent=0 // pred_region
    _
  $region29: #{_lambda_.3} parent=0 // pred_fallthru
    _
  // Predicated region
  $region30: #{_lambda_.3} parent=0 // pred_check
    _
  $region31: #{_lambda_.3} parent=0 // pred_check_branch
    %28 = sbr.rel (0) target = $region33
  $region32: #{_lambda_.3} parent=0 // pred_region
    _
  $region33: #{_lambda_.3} parent=0 // pred_fallthru
    _
  %v30 = vld [vmem:[%s0] sm:$0xf]
  %v31 = vld [vmem:[%s0 + $0x4] sm:$0xf]
  %v32 = vld [vmem:[%s0 + $0x8] sm:$0xf]
  %v33 = vld [vmem:[%s0 + $0xc] sm:$0xf]
  %v34 = vld [vmem:[%s1] sm:$0xf]
  %v35 = vld [vmem:[%s1 + $0x4] sm:$0xf]
  %v36 = vld [vmem:[%s1 + $0x8] sm:$0xf]
  %v37 = vld [vmem:[%s1 + $0xc] sm:$0xf]
  %v38 = vld [vmem:[%s1 + $0x10] sm:$0xf]
  %v39 = vld [vmem:[%s1 + $0x14] sm:$0xf]
  %v40 = vld [vmem:[%s1 + $0x18] sm:$0xf]
  %v41 = vld [vmem:[%s1 + $0x1c] sm:$0xf]
  %v42 = vld [vmem:[%s1 + $0x20] sm:$0xf]
  %v43 = vld [vmem:[%s1 + $0x24] sm:$0xf]
  %v44 = vld [vmem:[%s1 + $0x28] sm:$0xf]
  %v45 = vld [vmem:[%s1 + $0x2c] sm:$0xf]
  %v46 = vld [vmem:[%s1 + $0x30] sm:$0xf]
  %v47 = vld [vmem:[%s1 + $0x34] sm:$0xf]
  %v48 = vld [vmem:[%s1 + $0x38] sm:$0xf]
  %v49 = vld [vmem:[%s1 + $0x3c] sm:$0xf]
  %s50 = scalar_lea.vmem %s0, 24
  %v51 = vld [vmem:[%s50] sm:$0xf]
  %v52 = vld [vmem:[%s50 + $0x4] sm:$0xf]
  %v53 = vld [vmem:[%s50 + $0x8] sm:$0xf]
  %v54 = vld [vmem:[%s50 + $0xc] sm:$0xf]
  %s55 = scalar_lea.vmem %s1, 64
  %v56 = vld [vmem:[%s55] sm:$0xf]
  %v57 = vld [vmem:[%s55 + $0x4] sm:$0xf]
  %v58 = vld [vmem:[%s55 + $0x8] sm:$0xf]
  %v59 = vld [vmem:[%s55 + $0xc] sm:$0xf]
  %v60 = vld [vmem:[%s55 + $0x10] sm:$0xf]
  %v61 = vld [vmem:[%s55 + $0x14] sm:$0xf]
  %v62 = vld [vmem:[%s55 + $0x18] sm:$0xf]
  %v63 = vld [vmem:[%s55 + $0x1c] sm:$0xf]
  %v64 = vld [vmem:[%s55 + $0x20] sm:$0xf]
  %v65 = vld [vmem:[%s55 + $0x24] sm:$0xf]
  %v66 = vld [vmem:[%s55 + $0x28] sm:$0xf]
  %v67 = vld [vmem:[%s55 + $0x2c] sm:$0xf]
  %v68 = vld [vmem:[%s55 + $0x30] sm:$0xf]
  %v69 = vld [vmem:[%s55 + $0x34] sm:$0xf]
  %v70 = vld [vmem:[%s55 + $0x38] sm:$0xf]
  %v71 = vld [vmem:[%s55 + $0x3c] sm:$0xf]
  %v76 = vunpack.c.l.b16 %v51
  %v77 = vunpack.c.l.b16 %v52
  %v78 = vunpack.c.l.b16 %v53
  %v79 = vunpack.c.l.b16 %v54
  %v80 = vpack.c.b16 %v77, %v76
  %v81 = vpack.c.b16 %v79, %v78
  %v100 = vunpack.c.l.b16 %v56
  %v101 = vunpack.c.l.b16 %v57
  %v102 = vunpack.c.l.b16 %v58
  %v103 = vunpack.c.l.b16 %v59
  %v104 = vunpack.c.l.b16 %v60
  %v105 = vunpack.c.l.b16 %v61
  %v106 = vunpack.c.l.b16 %v62
  %v107 = vunpack.c.l.b16 %v63
  %v108 = vunpack.c.l.b16 %v64
  %v109 = vunpack.c.l.b16 %v65
  %v110 = vunpack.c.l.b16 %v66
  %v111 = vunpack.c.l.b16 %v67
  %v112 = vunpack.c.l.b16 %v68
  %v113 = vunpack.c.l.b16 %v69
  %v114 = vunpack.c.l.b16 %v70
  %v115 = vunpack.c.l.b16 %v71
  %v116 = vpack.c.b16 %v101, %v100
  %v117 = vpack.c.b16 %v103, %v102
  %v118 = vpack.c.b16 %v105, %v104
  %v119 = vpack.c.b16 %v107, %v106
  %v120 = vpack.c.b16 %v109, %v108
  %v121 = vpack.c.b16 %v111, %v110
  %v122 = vpack.c.b16 %v113, %v112
  %v123 = vpack.c.b16 %v115, %v114
  %132 = vmatprep.subr.bf16.mxu0 0
  %133 = vmatpush1.bf16.msra.mxu0 %v116
  %134 = vmatprep.subr.bf16.mxu0 0
  %135 = vmatpush1.bf16.msra.mxu0 %v117
  %136 = vmatprep.subr.bf16.mxu0 0
  %137 = vmatpush1.bf16.msra.mxu0 %v118
  %138 = vmatprep.subr.bf16.mxu0 0
  %139 = vmatpush1.bf16.msra.mxu0 %v119
  %140 = vmatprep.subr.bf16.mxu0 0
  %141 = vmatpush1.bf16.msra.mxu0 %v120
  %142 = vmatprep.subr.bf16.mxu0 0
  %143 = vmatpush1.bf16.msra.mxu0 %v121
  %144 = vmatprep.subr.bf16.mxu0 0
  %145 = vmatpush1.bf16.msra.mxu0 %v122
  %146 = vmatprep.subr.bf16.mxu0 0
  %147 = vmatpush1.bf16.msra.mxu0 %v123
  %148 = vmatprep.subr.bf16.mxu0 0
  %149 = vmatpush1.bf16.msra.mxu0 0
  %150 = vmatprep.subr.bf16.mxu0 0
  %151 = vmatpush1.bf16.msra.mxu0 0
  %152 = vmatprep.subr.bf16.mxu0 0
  %153 = vmatpush1.bf16.msra.mxu0 0
  %154 = vmatprep.subr.bf16.mxu0 0
  %155 = vmatpush1.bf16.msra.mxu0 0
  %156 = vmatprep.subr.bf16.mxu0 0
  %157 = vmatpush1.bf16.msra.mxu0 0
  %158 = vmatprep.subr.bf16.mxu0 0
  %159 = vmatpush1.bf16.msra.mxu0 0
  %160 = vmatprep.subr.bf16.mxu0 0
  %161 = vmatpush1.bf16.msra.mxu0 0
  %162 = vmatprep.subr.bf16.mxu0 0
  %163 = vmatpush1.bf16.msra.mxu0 0
  %164 = vmatprep.mubr.bf16.mxu0 0
  %165 = vmatmul.mubr.bf16.gmra.mrb[0].mxu0 %v80
  %v166 = vpop.f32.mrb[0].mxu0
  %v167 = vadd.f32 0.0, %v166
  %v168 = vpop.f32.mrb[0].mxu0
  %v169 = vpop.f32.mrb[0].mxu0
  %v170 = vadd.f32 0.0, %v169
  %v171 = vpop.f32.mrb[0].mxu0
  %172 = vmatprep.mubr.bf16.mxu0 0
  %173 = vmatmul.mubr.bf16.gmra.mrb[0].mxu0 %v81
  %v174 = vpop.f32.mrb[0].mxu0
  %v175 = vadd.f32 0.0, %v174
  %v176 = vpop.f32.mrb[0].mxu0
  %v177 = vpop.f32.mrb[0].mxu0
  %v178 = vadd.f32 0.0, %v177
  %v179 = vpop.f32.mrb[0].mxu0
  %180 = vdwg.mxu0
  %v185 = vunpack.c.l.b16 %v30
  %v186 = vunpack.c.l.b16 %v31
  %v187 = vunpack.c.l.b16 %v32
  %v188 = vunpack.c.l.b16 %v33
  %v189 = vpack.c.b16 %v186, %v185
  %v190 = vpack.c.b16 %v188, %v187
  %v209 = vunpack.c.l.b16 %v34
  %v210 = vunpack.c.l.b16 %v35
  %v211 = vunpack.c.l.b16 %v36
  %v212 = vunpack.c.l.b16 %v37
  %v213 = vunpack.c.l.b16 %v38
  %v214 = vunpack.c.l.b16 %v39
  %v215 = vunpack.c.l.b16 %v40
  %v216 = vunpack.c.l.b16 %v41
  %v217 = vunpack.c.l.b16 %v42
  %v218 = vunpack.c.l.b16 %v43
  %v219 = vunpack.c.l.b16 %v44
  %v220 = vunpack.c.l.b16 %v45
  %v221 = vunpack.c.l.b16 %v46
  %v222 = vunpack.c.l.b16 %v47
  %v223 = vunpack.c.l.b16 %v48
  %v224 = vunpack.c.l.b16 %v49
  %v225 = vpack.c.b16 %v210, %v209
  %v226 = vpack.c.b16 %v212, %v211
  %v227 = vpack.c.b16 %v214, %v213
  %v228 = vpack.c.b16 %v216, %v215
  %v229 = vpack.c.b16 %v218, %v217
  %v230 = vpack.c.b16 %v220, %v219
  %v231 = vpack.c.b16 %v222, %v221
  %v232 = vpack.c.b16 %v224, %v223
  %241 = vmatprep.subr.bf16.mxu0 0
  %242 = vmatpush1.bf16.msra.mxu0 %v225
  %243 = vmatprep.subr.bf16.mxu0 0
  %244 = vmatpush1.bf16.msra.mxu0 %v226
  %245 = vmatprep.subr.bf16.mxu0 0
  %246 = vmatpush1.bf16.msra.mxu0 %v227
  %247 = vmatprep.subr.bf16.mxu0 0
  %248 = vmatpush1.bf16.msra.mxu0 %v228
  %249 = vmatprep.subr.bf16.mxu0 0
  %250 = vmatpush1.bf16.msra.mxu0 %v229
  %251 = vmatprep.subr.bf16.mxu0 0
  %252 = vmatpush1.bf16.msra.mxu0 %v230
  %253 = vmatprep.subr.bf16.mxu0 0
  %254 = vmatpush1.bf16.msra.mxu0 %v231
  %255 = vmatprep.subr.bf16.mxu0 0
  %256 = vmatpush1.bf16.msra.mxu0 %v232
  %257 = vmatprep.subr.bf16.mxu0 0
  %258 = vmatpush1.bf16.msra.mxu0 0
  %259 = vmatprep.subr.bf16.mxu0 0
  %260 = vmatpush1.bf16.msra.mxu0 0
  %261 = vmatprep.subr.bf16.mxu0 0
  %262 = vmatpush1.bf16.msra.mxu0 0
  %263 = vmatprep.subr.bf16.mxu0 0
  %264 = vmatpush1.bf16.msra.mxu0 0
  %265 = vmatprep.subr.bf16.mxu0 0
  %266 = vmatpush1.bf16.msra.mxu0 0
  %267 = vmatprep.subr.bf16.mxu0 0
  %268 = vmatpush1.bf16.msra.mxu0 0
  %269 = vmatprep.subr.bf16.mxu0 0
  %270 = vmatpush1.bf16.msra.mxu0 0
  %271 = vmatprep.subr.bf16.mxu0 0
  %272 = vmatpush1.bf16.msra.mxu0 0
  %273 = vmatprep.mubr.bf16.mxu0 0
  %274 = vmatmul.mubr.bf16.gmra.mrb[0].mxu0 %v189
  %v275 = vpop.f32.mrb[0].mxu0
  %v276 = vadd.f32 %v167, %v275
  %v277 = vpop.f32.mrb[0].mxu0
  %v278 = vpop.f32.mrb[0].mxu0
  %v279 = vadd.f32 %v170, %v278
  %v280 = vpop.f32.mrb[0].mxu0
  %281 = vmatprep.mubr.bf16.mxu0 0
  %282 = vmatmul.mubr.bf16.gmra.mrb[0].mxu0 %v190
  %v283 = vpop.f32.mrb[0].mxu0
  %v284 = vadd.f32 %v175, %v283
  %v285 = vpop.f32.mrb[0].mxu0
  %v286 = vpop.f32.mrb[0].mxu0
  %v287 = vadd.f32 %v178, %v286
  %v288 = vpop.f32.mrb[0].mxu0
  %289 = vdwg.mxu0
  %s290 = scalar_lea.vmem %s0, 48
  %v291 = vld [vmem:[%s290] sm:$0xf]
  %v292 = vld [vmem:[%s290 + $0x4] sm:$0xf]
  %v293 = vld [vmem:[%s290 + $0x8] sm:$0xf]
  %v294 = vld [vmem:[%s290 + $0xc] sm:$0xf]
  %s295 = scalar_lea.vmem %s1, 128
  %v296 = vld [vmem:[%s295] sm:$0xf]
  %v297 = vld [vmem:[%s295 + $0x4] sm:$0xf]
  %v298 = vld [vmem:[%s295 + $0x8] sm:$0xf]
  %v299 = vld [vmem:[%s295 + $0xc] sm:$0xf]
  %v300 = vld [vmem:[%s295 + $0x10] sm:$0xf]
  %v301 = vld [vmem:[%s295 + $0x14] sm:$0xf]
  %v302 = vld [vmem:[%s295 + $0x18] sm:$0xf]
  %v303 = vld [vmem:[%s295 + $0x1c] sm:$0xf]
  %v304 = vld [vmem:[%s295 + $0x20] sm:$0xf]
  %v305 = vld [vmem:[%s295 + $0x24] sm:$0xf]
  %v306 = vld [vmem:[%s295 + $0x28] sm:$0xf]
  %v307 = vld [vmem:[%s295 + $0x2c] sm:$0xf]
  %v308 = vld [vmem:[%s295 + $0x30] sm:$0xf]
  %v309 = vld [vmem:[%s295 + $0x34] sm:$0xf]
  %v310 = vld [vmem:[%s295 + $0x38] sm:$0xf]
  %v311 = vld [vmem:[%s295 + $0x3c] sm:$0xf]
  %v316 = vunpack.c.l.b16 %v291
  %v317 = vunpack.c.l.b16 %v292
  %v318 = vunpack.c.l.b16 %v293
  %v319 = vunpack.c.l.b16 %v294
  %v320 = vpack.c.b16 %v317, %v316
  %v321 = vpack.c.b16 %v319, %v318
  %v340 = vunpack.c.l.b16 %v296
  %v341 = vunpack.c.l.b16 %v297
  %v342 = vunpack.c.l.b16 %v298
  %v343 = vunpack.c.l.b16 %v299
  %v344 = vunpack.c.l.b16 %v300
  %v345 = vunpack.c.l.b16 %v301
  %v346 = vunpack.c.l.b16 %v302
  %v347 = vunpack.c.l.b16 %v303
  %v348 = vunpack.c.l.b16 %v304
  %v349 = vunpack.c.l.b16 %v305
  %v350 = vunpack.c.l.b16 %v306
  %v351 = vunpack.c.l.b16 %v307
  %v352 = vunpack.c.l.b16 %v308
  %v353 = vunpack.c.l.b16 %v309
  %v354 = vunpack.c.l.b16 %v310
  %v355 = vunpack.c.l.b16 %v311
  %v356 = vpack.c.b16 %v341, %v340
  %v357 = vpack.c.b16 %v343, %v342
  %v358 = vpack.c.b16 %v345, %v344
  %v359 = vpack.c.b16 %v347, %v346
  %v360 = vpack.c.b16 %v349, %v348
  %v361 = vpack.c.b16 %v351, %v350
  %v362 = vpack.c.b16 %v353, %v352
  %v363 = vpack.c.b16 %v355, %v354
  %372 = vmatprep.subr.bf16.mxu0 0
  %373 = vmatpush1.bf16.msra.mxu0 %v356
  %374 = vmatprep.subr.bf16.mxu0 0
  %375 = vmatpush1.bf16.msra.mxu0 %v357
  %376 = vmatprep.subr.bf16.mxu0 0
  %377 = vmatpush1.bf16.msra.mxu0 %v358
  %378 = vmatprep.subr.bf16.mxu0 0
  %379 = vmatpush1.bf16.msra.mxu0 %v359
  %380 = vmatprep.subr.bf16.mxu0 0
  %381 = vmatpush1.bf16.msra.mxu0 %v360
  %382 = vmatprep.subr.bf16.mxu0 0
  %383 = vmatpush1.bf16.msra.mxu0 %v361
  %384 = vmatprep.subr.bf16.mxu0 0
  %385 = vmatpush1.bf16.msra.mxu0 %v362
  %386 = vmatprep.subr.bf16.mxu0 0
  %387 = vmatpush1.bf16.msra.mxu0 %v363
  %388 = vmatprep.subr.bf16.mxu0 0
  %389 = vmatpush1.bf16.msra.mxu0 0
  %390 = vmatprep.subr.bf16.mxu0 0
  %391 = vmatpush1.bf16.msra.mxu0 0
  %392 = vmatprep.subr.bf16.mxu0 0
  %393 = vmatpush1.bf16.msra.mxu0 0
  %394 = vmatprep.subr.bf16.mxu0 0
  %395 = vmatpush1.bf16.msra.mxu0 0
  %396 = vmatprep.subr.bf16.mxu0 0
  %397 = vmatpush1.bf16.msra.mxu0 0
  %398 = vmatprep.subr.bf16.mxu0 0
  %399 = vmatpush1.bf16.msra.mxu0 0
  %400 = vmatprep.subr.bf16.mxu0 0
  %401 = vmatpush1.bf16.msra.mxu0 0
  %402 = vmatprep.subr.bf16.mxu0 0
  %403 = vmatpush1.bf16.msra.mxu0 0
  %404 = vmatprep.mubr.bf16.mxu0 0
  %405 = vmatmul.mubr.bf16.gmra.mrb[0].mxu0 %v320
  %v406 = vpop.f32.mrb[0].mxu0
  %v407 = vadd.f32 0.0, %v406
  %v408 = vpop.f32.mrb[0].mxu0
  %v409 = vpop.f32.mrb[0].mxu0
  %v410 = vadd.f32 0.0, %v409
  %v411 = vpop.f32.mrb[0].mxu0
  %412 = vmatprep.mubr.bf16.mxu0 0
  %413 = vmatmul.mubr.bf16.gmra.mrb[0].mxu0 %v321
  %v414 = vpop.f32.mrb[0].mxu0
  %v415 = vadd.f32 0.0, %v414
  %v416 = vpop.f32.mrb[0].mxu0
  %v417 = vpop.f32.mrb[0].mxu0
  %v418 = vadd.f32 0.0, %v417
  %v419 = vpop.f32.mrb[0].mxu0
  %420 = vdwg.mxu0
  %v421 = vadd.f32 %v276, %v407
  %v422 = vadd.f32 %v279, %v410
  %v423 = vadd.f32 %v284, %v415
  %v424 = vadd.f32 %v287, %v418
  %v425 = vld [vmem:[%s0 + $0x4] sm:$0xf]
  %v426 = vld [vmem:[%s0 + $0x8] sm:$0xf]
  %v427 = vld [vmem:[%s0 + $0xc] sm:$0xf]
  %v428 = vld [vmem:[%s0 + $0x10] sm:$0xf]
  %s429 = scalar_lea.vmem %s1, 192
  %v430 = vld [vmem:[%s429] sm:$0xf]
  %v431 = vld [vmem:[%s429 + $0x4] sm:$0xf]
  %v432 = vld [vmem:[%s429 + $0x8] sm:$0xf]
  %v433 = vld [vmem:[%s429 + $0xc] sm:$0xf]
  %v434 = vld [vmem:[%s429 + $0x10] sm:$0xf]
  %v435 = vld [vmem:[%s429 + $0x14] sm:$0xf]
  %v436 = vld [vmem:[%s429 + $0x18] sm:$0xf]
  %v437 = vld [vmem:[%s429 + $0x1c] sm:$0xf]
  %v438 = vld [vmem:[%s429 + $0x20] sm:$0xf]
  %v439 = vld [vmem:[%s429 + $0x24] sm:$0xf]
  %v440 = vld [vmem:[%s429 + $0x28] sm:$0xf]
  %v441 = vld [vmem:[%s429 + $0x2c] sm:$0xf]
  %v442 = vld [vmem:[%s429 + $0x30] sm:$0xf]
  %v443 = vld [vmem:[%s429 + $0x34] sm:$0xf]
  %v444 = vld [vmem:[%s429 + $0x38] sm:$0xf]
  %v445 = vld [vmem:[%s429 + $0x3c] sm:$0xf]
  %v450 = vunpack.c.l.b16 %v425
  %v451 = vunpack.c.l.b16 %v426
  %v452 = vunpack.c.l.b16 %v427
  %v453 = vunpack.c.l.b16 %v428
  %v454 = vpack.c.b16 %v451, %v450
  %v455 = vpack.c.b16 %v453, %v452
  %v474 = vunpack.c.l.b16 %v430
  %v475 = vunpack.c.l.b16 %v431
  %v476 = vunpack.c.l.b16 %v432
  %v477 = vunpack.c.l.b16 %v433
  %v478 = vunpack.c.l.b16 %v434
  %v479 = vunpack.c.l.b16 %v435
  %v480 = vunpack.c.l.b16 %v436
  %v481 = vunpack.c.l.b16 %v437
  %v482 = vunpack.c.l.b16 %v438
  %v483 = vunpack.c.l.b16 %v439
  %v484 = vunpack.c.l.b16 %v440
  %v485 = vunpack.c.l.b16 %v441
  %v486 = vunpack.c.l.b16 %v442
  %v487 = vunpack.c.l.b16 %v443
  %v488 = vunpack.c.l.b16 %v444
  %v489 = vunpack.c.l.b16 %v445
  %v490 = vpack.c.b16 %v475, %v474
  %v491 = vpack.c.b16 %v477, %v476
  %v492 = vpack.c.b16 %v479, %v478
  %v493 = vpack.c.b16 %v481, %v480
  %v494 = vpack.c.b16 %v483, %v482
  %v495 = vpack.c.b16 %v485, %v484
  %v496 = vpack.c.b16 %v487, %v486
  %v497 = vpack.c.b16 %v489, %v488
  %506 = vmatprep.subr.bf16.mxu0 0
  %507 = vmatpush1.bf16.msra.mxu0 %v490
  %508 = vmatprep.subr.bf16.mxu0 0
  %509 = vmatpush1.bf16.msra.mxu0 %v491
  %510 = vmatprep.subr.bf16.mxu0 0
  %511 = vmatpush1.bf16.msra.mxu0 %v492
  %512 = vmatprep.subr.bf16.mxu0 0
  %513 = vmatpush1.bf16.msra.mxu0 %v493
  %514 = vmatprep.subr.bf16.mxu0 0
  %515 = vmatpush1.bf16.msra.mxu0 %v494
  %516 = vmatprep.subr.bf16.mxu0 0
  %517 = vmatpush1.bf16.msra.mxu0 %v495
  %518 = vmatprep.subr.bf16.mxu0 0
  %519 = vmatpush1.bf16.msra.mxu0 %v496
  %520 = vmatprep.subr.bf16.mxu0 0
  %521 = vmatpush1.bf16.msra.mxu0 %v497
  %522 = vmatprep.subr.bf16.mxu0 0
  %523 = vmatpush1.bf16.msra.mxu0 0
  %524 = vmatprep.subr.bf16.mxu0 0
  %525 = vmatpush1.bf16.msra.mxu0 0
  %526 = vmatprep.subr.bf16.mxu0 0
  %527 = vmatpush1.bf16.msra.mxu0 0
  %528 = vmatprep.subr.bf16.mxu0 0
  %529 = vmatpush1.bf16.msra.mxu0 0
  %530 = vmatprep.subr.bf16.mxu0 0
  %531 = vmatpush1.bf16.msra.mxu0 0
  %532 = vmatprep.subr.bf16.mxu0 0
  %533 = vmatpush1.bf16.msra.mxu0 0
  %534 = vmatprep.subr.bf16.mxu0 0
  %535 = vmatpush1.bf16.msra.mxu0 0
  %536 = vmatprep.subr.bf16.mxu0 0
  %537 = vmatpush1.bf16.msra.mxu0 0
  %538 = vmatprep.mubr.bf16.mxu0 0
  %539 = vmatmul.mubr.bf16.gmra.mrb[0].mxu0 %v454
  %v540 = vpop.f32.mrb[0].mxu0
  %v541 = vadd.f32 0.0, %v540
  %v542 = vpop.f32.mrb[0].mxu0
  %v543 = vpop.f32.mrb[0].mxu0
  %v544 = vadd.f32 0.0, %v543
  %v545 = vpop.f32.mrb[0].mxu0
  %546 = vmatprep.mubr.bf16.mxu0 0
  %547 = vmatmul.mubr.bf16.gmra.mrb[0].mxu0 %v455
  %v548 = vpop.f32.mrb[0].mxu0
  %v549 = vadd.f32 0.0, %v548
  %v550 = vpop.f32.mrb[0].mxu0
  %v551 = vpop.f32.mrb[0].mxu0
  %v552 = vadd.f32 0.0, %v551
  %v553 = vpop.f32.mrb[0].mxu0
  %554 = vdwg.mxu0
  %v555 = vadd.f32 %v421, %v541
  %v556 = vadd.f32 %v422, %v544
  %v557 = vadd.f32 %v423, %v549
  %v558 = vadd.f32 %v424, %v552
  %v559 = vld [vmem:[%s50 + $0x4] sm:$0xf]
  %v560 = vld [vmem:[%s50 + $0x8] sm:$0xf]
  %v561 = vld [vmem:[%s50 + $0xc] sm:$0xf]
  %v562 = vld [vmem:[%s50 + $0x10] sm:$0xf]
  %s563 = scalar_lea.vmem %s1, 256
  %v564 = vld [vmem:[%s563] sm:$0xf]
  %v565 = vld [vmem:[%s563 + $0x4] sm:$0xf]
  %v566 = vld [vmem:[%s563 + $0x8] sm:$0xf]
  %v567 = vld [vmem:[%s563 + $0xc] sm:$0xf]
  %v568 = vld [vmem:[%s563 + $0x10] sm:$0xf]
  %v569 = vld [vmem:[%s563 + $0x14] sm:$0xf]
  %v570 = vld [vmem:[%s563 + $0x18] sm:$0xf]
  %v571 = vld [vmem:[%s563 + $0x1c] sm:$0xf]
  %v572 = vld [vmem:[%s563 + $0x20] sm:$0xf]
  %v573 = vld [vmem:[%s563 + $0x24] sm:$0xf]
  %v574 = vld [vmem:[%s563 + $0x28] sm:$0xf]
  %v575 = vld [vmem:[%s563 + $0x2c] sm:$0xf]
  %v576 = vld [vmem:[%s563 + $0x30] sm:$0xf]
  %v577 = vld [vmem:[%s563 + $0x34] sm:$0xf]
  %v578 = vld [vmem:[%s563 + $0x38] sm:$0xf]
  %v579 = vld [vmem:[%s563 + $0x3c] sm:$0xf]
  %v584 = vunpack.c.l.b16 %v559
  %v585 = vunpack.c.l.b16 %v560
  %v586 = vunpack.c.l.b16 %v561
  %v587 = vunpack.c.l.b16 %v562
  %v588 = vpack.c.b16 %v585, %v584
  %v589 = vpack.c.b16 %v587, %v586
  %v608 = vunpack.c.l.b16 %v564
  %v609 = vunpack.c.l.b16 %v565
  %v610 = vunpack.c.l.b16 %v566
  %v611 = vunpack.c.l.b16 %v567
  %v612 = vunpack.c.l.b16 %v568
  %v613 = vunpack.c.l.b16 %v569
  %v614 = vunpack.c.l.b16 %v570
  %v615 = vunpack.c.l.b16 %v571
  %v616 = vunpack.c.l.b16 %v572
  %v617 = vunpack.c.l.b16 %v573
  %v618 = vunpack.c.l.b16 %v574
  %v619 = vunpack.c.l.b16 %v575
  %v620 = vunpack.c.l.b16 %v576
  %v621 = vunpack.c.l.b16 %v577
  %v622 = vunpack.c.l.b16 %v578
  %v623 = vunpack.c.l.b16 %v579
  %v624 = vpack.c.b16 %v609, %v608
  %v625 = vpack.c.b16 %v611, %v610
  %v626 = vpack.c.b16 %v613, %v612
  %v627 = vpack.c.b16 %v615, %v614
  %v628 = vpack.c.b16 %v617, %v616
  %v629 = vpack.c.b16 %v619, %v618
  %v630 = vpack.c.b16 %v621, %v620
  %v631 = vpack.c.b16 %v623, %v622
  %640 = vmatprep.subr.bf16.mxu0 0
  %641 = vmatpush1.bf16.msra.mxu0 %v624
  %642 = vmatprep.subr.bf16.mxu0 0
  %643 = vmatpush1.bf16.msra.mxu0 %v625
  %644 = vmatprep.subr.bf16.mxu0 0
  %645 = vmatpush1.bf16.msra.mxu0 %v626
  %646 = vmatprep.subr.bf16.mxu0 0
  %647 = vmatpush1.bf16.msra.mxu0 %v627
  %648 = vmatprep.subr.bf16.mxu0 0
  %649 = vmatpush1.bf16.msra.mxu0 %v628
  %650 = vmatprep.subr.bf16.mxu0 0
  %651 = vmatpush1.bf16.msra.mxu0 %v629
  %652 = vmatprep.subr.bf16.mxu0 0
  %653 = vmatpush1.bf16.msra.mxu0 %v630
  %654 = vmatprep.subr.bf16.mxu0 0
  %655 = vmatpush1.bf16.msra.mxu0 %v631
  %656 = vmatprep.subr.bf16.mxu0 0
  %657 = vmatpush1.bf16.msra.mxu0 0
  %658 = vmatprep.subr.bf16.mxu0 0
  %659 = vmatpush1.bf16.msra.mxu0 0
  %660 = vmatprep.subr.bf16.mxu0 0
  %661 = vmatpush1.bf16.msra.mxu0 0
  %662 = vmatprep.subr.bf16.mxu0 0
  %663 = vmatpush1.bf16.msra.mxu0 0
  %664 = vmatprep.subr.bf16.mxu0 0
  %665 = vmatpush1.bf16.msra.mxu0 0
  %666 = vmatprep.subr.bf16.mxu0 0
  %667 = vmatpush1.bf16.msra.mxu0 0
  %668 = vmatprep.subr.bf16.mxu0 0
  %669 = vmatpush1.bf16.msra.mxu0 0
  %670 = vmatprep.subr.bf16.mxu0 0
  %671 = vmatpush1.bf16.msra.mxu0 0
  %672 = vmatprep.mubr.bf16.mxu0 0
  %673 = vmatmul.mubr.bf16.gmra.mrb[0].mxu0 %v588
  %v674 = vpop.f32.mrb[0].mxu0
  %v675 = vadd.f32 0.0, %v674
  %v676 = vpop.f32.mrb[0].mxu0
  %v677 = vpop.f32.mrb[0].mxu0
  %v678 = vadd.f32 0.0, %v677
  %v679 = vpop.f32.mrb[0].mxu0
  %680 = vmatprep.mubr.bf16.mxu0 0
  %681 = vmatmul.mubr.bf16.gmra.mrb[0].mxu0 %v589
  %v682 = vpop.f32.mrb[0].mxu0
  %v683 = vadd.f32 0.0, %v682
  %v684 = vpop.f32.mrb[0].mxu0
  %v685 = vpop.f32.mrb[0].mxu0
  %v686 = vadd.f32 0.0, %v685
  %v687 = vpop.f32.mrb[0].mxu0
  %688 = vdwg.mxu0
  %v689 = vadd.f32 %v555, %v675
  %v690 = vadd.f32 %v556, %v678
  %v691 = vadd.f32 %v557, %v683
  %v692 = vadd.f32 %v558, %v686
  %v693 = vld [vmem:[%s290 + $0x4] sm:$0xf]
  %v694 = vld [vmem:[%s290 + $0x8] sm:$0xf]
  %v695 = vld [vmem:[%s290 + $0xc] sm:$0xf]
  %v696 = vld [vmem:[%s290 + $0x10] sm:$0xf]
  %s697 = scalar_lea.vmem %s1, 320
  %v698 = vld [vmem:[%s697] sm:$0xf]
  %v699 = vld [vmem:[%s697 + $0x4] sm:$0xf]
  %v700 = vld [vmem:[%s697 + $0x8] sm:$0xf]
  %v701 = vld [vmem:[%s697 + $0xc] sm:$0xf]
  %v702 = vld [vmem:[%s697 + $0x10] sm:$0xf]
  %v703 = vld [vmem:[%s697 + $0x14] sm:$0xf]
  %v704 = vld [vmem:[%s697 + $0x18] sm:$0xf]
  %v705 = vld [vmem:[%s697 + $0x1c] sm:$0xf]
  %v706 = vld [vmem:[%s697 + $0x20] sm:$0xf]
  %v707 = vld [vmem:[%s697 + $0x24] sm:$0xf]
  %v708 = vld [vmem:[%s697 + $0x28] sm:$0xf]
  %v709 = vld [vmem:[%s697 + $0x2c] sm:$0xf]
  %v710 = vld [vmem:[%s697 + $0x30] sm:$0xf]
  %v711 = vld [vmem:[%s697 + $0x34] sm:$0xf]
  %v712 = vld [vmem:[%s697 + $0x38] sm:$0xf]
  %v713 = vld [vmem:[%s697 + $0x3c] sm:$0xf]
  %v718 = vunpack.c.l.b16 %v693
  %v719 = vunpack.c.l.b16 %v694
  %v720 = vunpack.c.l.b16 %v695
  %v721 = vunpack.c.l.b16 %v696
  %v722 = vpack.c.b16 %v719, %v718
  %v723 = vpack.c.b16 %v721, %v720
  %v742 = vunpack.c.l.b16 %v698
  %v743 = vunpack.c.l.b16 %v699
  %v744 = vunpack.c.l.b16 %v700
  %v745 = vunpack.c.l.b16 %v701
  %v746 = vunpack.c.l.b16 %v702
  %v747 = vunpack.c.l.b16 %v703
  %v748 = vunpack.c.l.b16 %v704
  %v749 = vunpack.c.l.b16 %v705
  %v750 = vunpack.c.l.b16 %v706
  %v751 = vunpack.c.l.b16 %v707
  %v752 = vunpack.c.l.b16 %v708
  %v753 = vunpack.c.l.b16 %v709
  %v754 = vunpack.c.l.b16 %v710
  %v755 = vunpack.c.l.b16 %v711
  %v756 = vunpack.c.l.b16 %v712
  %v757 = vunpack.c.l.b16 %v713
  %v758 = vpack.c.b16 %v743, %v742
  %v759 = vpack.c.b16 %v745, %v744
  %v760 = vpack.c.b16 %v747, %v746
  %v761 = vpack.c.b16 %v749, %v748
  %v762 = vpack.c.b16 %v751, %v750
  %v763 = vpack.c.b16 %v753, %v752
  %v764 = vpack.c.b16 %v755, %v754
  %v765 = vpack.c.b16 %v757, %v756
  %774 = vmatprep.subr.bf16.mxu0 0
  %775 = vmatpush1.bf16.msra.mxu0 %v758
  %776 = vmatprep.subr.bf16.mxu0 0
  %777 = vmatpush1.bf16.msra.mxu0 %v759
  %778 = vmatprep.subr.bf16.mxu0 0
  %779 = vmatpush1.bf16.msra.mxu0 %v760
  %780 = vmatprep.subr.bf16.mxu0 0
  %781 = vmatpush1.bf16.msra.mxu0 %v761
  %782 = vmatprep.subr.bf16.mxu0 0
  %783 = vmatpush1.bf16.msra.mxu0 %v762
  %784 = vmatprep.subr.bf16.mxu0 0
  %785 = vmatpush1.bf16.msra.mxu0 %v763
  %786 = vmatprep.subr.bf16.mxu0 0
  %787 = vmatpush1.bf16.msra.mxu0 %v764
  %788 = vmatprep.subr.bf16.mxu0 0
  %789 = vmatpush1.bf16.msra.mxu0 %v765
  %790 = vmatprep.subr.bf16.mxu0 0
  %791 = vmatpush1.bf16.msra.mxu0 0
  %792 = vmatprep.subr.bf16.mxu0 0
  %793 = vmatpush1.bf16.msra.mxu0 0
  %794 = vmatprep.subr.bf16.mxu0 0
  %795 = vmatpush1.bf16.msra.mxu0 0
  %796 = vmatprep.subr.bf16.mxu0 0
  %797 = vmatpush1.bf16.msra.mxu0 0
  %798 = vmatprep.subr.bf16.mxu0 0
  %799 = vmatpush1.bf16.msra.mxu0 0
  %800 = vmatprep.subr.bf16.mxu0 0
  %801 = vmatpush1.bf16.msra.mxu0 0
  %802 = vmatprep.subr.bf16.mxu0 0
  %803 = vmatpush1.bf16.msra.mxu0 0
  %804 = vmatprep.subr.bf16.mxu0 0
  %805 = vmatpush1.bf16.msra.mxu0 0
  %806 = vmatprep.mubr.bf16.mxu0 0
  %807 = vmatmul.mubr.bf16.gmra.mrb[0].mxu0 %v722
  %v808 = vpop.f32.mrb[0].mxu0
  %v809 = vadd.f32 0.0, %v808
  %v810 = vpop.f32.mrb[0].mxu0
  %v811 = vpop.f32.mrb[0].mxu0
  %v812 = vadd.f32 0.0, %v811
  %v813 = vpop.f32.mrb[0].mxu0
  %814 = vmatprep.mubr.bf16.mxu0 0
  %815 = vmatmul.mubr.bf16.gmra.mrb[0].mxu0 %v723
  %v816 = vpop.f32.mrb[0].mxu0
  %v817 = vadd.f32 0.0, %v816
  %v818 = vpop.f32.mrb[0].mxu0
  %v819 = vpop.f32.mrb[0].mxu0
  %v820 = vadd.f32 0.0, %v819
  %v821 = vpop.f32.mrb[0].mxu0
  %822 = vdwg.mxu0
  %v823 = vadd.f32 %v689, %v809
  %v824 = vadd.f32 %v690, %v812
  %v825 = vadd.f32 %v691, %v817
  %v826 = vadd.f32 %v692, %v820
  %v827 = vld [vmem:[%s0 + $0x8] sm:$0xf]
  %v828 = vld [vmem:[%s0 + $0xc] sm:$0xf]
  %v829 = vld [vmem:[%s0 + $0x10] sm:$0xf]
  %v830 = vld [vmem:[%s0 + $0x14] sm:$0xf]
  %s831 = scalar_lea.vmem %s1, 384
  %v832 = vld [vmem:[%s831] sm:$0xf]
  %v833 = vld [vmem:[%s831 + $0x4] sm:$0xf]
  %v834 = vld [vmem:[%s831 + $0x8] sm:$0xf]
  %v835 = vld [vmem:[%s831 + $0xc] sm:$0xf]
  %v836 = vld [vmem:[%s831 + $0x10] sm:$0xf]
  %v837 = vld [vmem:[%s831 + $0x14] sm:$0xf]
  %v838 = vld [vmem:[%s831 + $0x18] sm:$0xf]
  %v839 = vld [vmem:[%s831 + $0x1c] sm:$0xf]
  %v840 = vld [vmem:[%s831 + $0x20] sm:$0xf]
  %v841 = vld [vmem:[%s831 + $0x24] sm:$0xf]
  %v842 = vld [vmem:[%s831 + $0x28] sm:$0xf]
  %v843 = vld [vmem:[%s831 + $0x2c] sm:$0xf]
  %v844 = vld [vmem:[%s831 + $0x30] sm:$0xf]
  %v845 = vld [vmem:[%s831 + $0x34] sm:$0xf]
  %v846 = vld [vmem:[%s831 + $0x38] sm:$0xf]
  %v847 = vld [vmem:[%s831 + $0x3c] sm:$0xf]
  %v852 = vunpack.c.l.b16 %v827
  %v853 = vunpack.c.l.b16 %v828
  %v854 = vunpack.c.l.b16 %v829
  %v855 = vunpack.c.l.b16 %v830
  %v856 = vpack.c.b16 %v853, %v852
  %v857 = vpack.c.b16 %v855, %v854
  %v876 = vunpack.c.l.b16 %v832
  %v877 = vunpack.c.l.b16 %v833
  %v878 = vunpack.c.l.b16 %v834
  %v879 = vunpack.c.l.b16 %v835
  %v880 = vunpack.c.l.b16 %v836
  %v881 = vunpack.c.l.b16 %v837
  %v882 = vunpack.c.l.b16 %v838
  %v883 = vunpack.c.l.b16 %v839
  %v884 = vunpack.c.l.b16 %v840
  %v885 = vunpack.c.l.b16 %v841
  %v886 = vunpack.c.l.b16 %v842
  %v887 = vunpack.c.l.b16 %v843
  %v888 = vunpack.c.l.b16 %v844
  %v889 = vunpack.c.l.b16 %v845
  %v890 = vunpack.c.l.b16 %v846
  %v891 = vunpack.c.l.b16 %v847
  %v892 = vpack.c.b16 %v877, %v876
  %v893 = vpack.c.b16 %v879, %v878
  %v894 = vpack.c.b16 %v881, %v880
  %v895 = vpack.c.b16 %v883, %v882
  %v896 = vpack.c.b16 %v885, %v884
  %v897 = vpack.c.b16 %v887, %v886
  %v898 = vpack.c.b16 %v889, %v888
  %v899 = vpack.c.b16 %v891, %v890
  %908 = vmatprep.subr.bf16.mxu0 0
  %909 = vmatpush1.bf16.msra.mxu0 %v892
  %910 = vmatprep.subr.bf16.mxu0 0
  %911 = vmatpush1.bf16.msra.mxu0 %v893
  %912 = vmatprep.subr.bf16.mxu0 0
  %913 = vmatpush1.bf16.msra.mxu0 %v894
  %914 = vmatprep.subr.bf16.mxu0 0
  %915 = vmatpush1.bf16.msra.mxu0 %v895
  %916 = vmatprep.subr.bf16.mxu0 0
  %917 = vmatpush1.bf16.msra.mxu0 %v896
  %918 = vmatprep.subr.bf16.mxu0 0
  %919 = vmatpush1.bf16.msra.mxu0 %v897
  %920 = vmatprep.subr.bf16.mxu0 0
  %921 = vmatpush1.bf16.msra.mxu0 %v898
  %922 = vmatprep.subr.bf16.mxu0 0
  %923 = vmatpush1.bf16.msra.mxu0 %v899
  %924 = vmatprep.subr.bf16.mxu0 0
  %925 = vmatpush1.bf16.msra.mxu0 0
  %926 = vmatprep.subr.bf16.mxu0 0
  %927 = vmatpush1.bf16.msra.mxu0 0
  %928 = vmatprep.subr.bf16.mxu0 0
  %929 = vmatpush1.bf16.msra.mxu0 0
  %930 = vmatprep.subr.bf16.mxu0 0
  %931 = vmatpush1.bf16.msra.mxu0 0
  %932 = vmatprep.subr.bf16.mxu0 0
  %933 = vmatpush1.bf16.msra.mxu0 0
  %934 = vmatprep.subr.bf16.mxu0 0
  %935 = vmatpush1.bf16.msra.mxu0 0
  %936 = vmatprep.subr.bf16.mxu0 0
  %937 = vmatpush1.bf16.msra.mxu0 0
  %938 = vmatprep.subr.bf16.mxu0 0
  %939 = vmatpush1.bf16.msra.mxu0 0
  %940 = vmatprep.mubr.bf16.mxu0 0
  %941 = vmatmul.mubr.bf16.gmra.mrb[0].mxu0 %v856
  %v942 = vpop.f32.mrb[0].mxu0
  %v943 = vadd.f32 0.0, %v942
  %v944 = vpop.f32.mrb[0].mxu0
  %v945 = vpop.f32.mrb[0].mxu0
  %v946 = vadd.f32 0.0, %v945
  %v947 = vpop.f32.mrb[0].mxu0
  %948 = vmatprep.mubr.bf16.mxu0 0
  %949 = vmatmul.mubr.bf16.gmra.mrb[0].mxu0 %v857
  %v950 = vpop.f32.mrb[0].mxu0
  %v951 = vadd.f32 0.0, %v950
  %v952 = vpop.f32.mrb[0].mxu0
  %v953 = vpop.f32.mrb[0].mxu0
  %v954 = vadd.f32 0.0, %v953
  %v955 = vpop.f32.mrb[0].mxu0
  %956 = vdwg.mxu0
  %v957 = vadd.f32 %v823, %v943
  %v958 = vadd.f32 %v824, %v946
  %v959 = vadd.f32 %v825, %v951
  %v960 = vadd.f32 %v826, %v954
  %v961 = vld [vmem:[%s50 + $0x8] sm:$0xf]
  %v962 = vld [vmem:[%s50 + $0xc] sm:$0xf]
  %v963 = vld [vmem:[%s50 + $0x10] sm:$0xf]
  %v964 = vld [vmem:[%s50 + $0x14] sm:$0xf]
  %s965 = scalar_lea.vmem %s1, 448
  %v966 = vld [vmem:[%s965] sm:$0xf]
  %v967 = vld [vmem:[%s965 + $0x4] sm:$0xf]
  %v968 = vld [vmem:[%s965 + $0x8] sm:$0xf]
  %v969 = vld [vmem:[%s965 + $0xc] sm:$0xf]
  %v970 = vld [vmem:[%s965 + $0x10] sm:$0xf]
  %v971 = vld [vmem:[%s965 + $0x14] sm:$0xf]
  %v972 = vld [vmem:[%s965 + $0x18] sm:$0xf]
  %v973 = vld [vmem:[%s965 + $0x1c] sm:$0xf]
  %v974 = vld [vmem:[%s965 + $0x20] sm:$0xf]
  %v975 = vld [vmem:[%s965 + $0x24] sm:$0xf]
  %v976 = vld [vmem:[%s965 + $0x28] sm:$0xf]
  %v977 = vld [vmem:[%s965 + $0x2c] sm:$0xf]
  %v978 = vld [vmem:[%s965 + $0x30] sm:$0xf]
  %v979 = vld [vmem:[%s965 + $0x34] sm:$0xf]
  %v980 = vld [vmem:[%s965 + $0x38] sm:$0xf]
  %v981 = vld [vmem:[%s965 + $0x3c] sm:$0xf]
  %v986 = vunpack.c.l.b16 %v961
  %v987 = vunpack.c.l.b16 %v962
  %v988 = vunpack.c.l.b16 %v963
  %v989 = vunpack.c.l.b16 %v964
  %v990 = vpack.c.b16 %v987, %v986
  %v991 = vpack.c.b16 %v989, %v988
  %v1010 = vunpack.c.l.b16 %v966
  %v1011 = vunpack.c.l.b16 %v967
  %v1012 = vunpack.c.l.b16 %v968
  %v1013 = vunpack.c.l.b16 %v969
  %v1014 = vunpack.c.l.b16 %v970
  %v1015 = vunpack.c.l.b16 %v971
  %v1016 = vunpack.c.l.b16 %v972
  %v1017 = vunpack.c.l.b16 %v973
  %v1018 = vunpack.c.l.b16 %v974
  %v1019 = vunpack.c.l.b16 %v975
  %v1020 = vunpack.c.l.b16 %v976
  %v1021 = vunpack.c.l.b16 %v977
  %v1022 = vunpack.c.l.b16 %v978
  %v1023 = vunpack.c.l.b16 %v979
  %v1024 = vunpack.c.l.b16 %v980
  %v1025 = vunpack.c.l.b16 %v981
  %v1026 = vpack.c.b16 %v1011, %v1010
  %v1027 = vpack.c.b16 %v1013, %v1012
  %v1028 = vpack.c.b16 %v1015, %v1014
  %v1029 = vpack.c.b16 %v1017, %v1016
  %v1030 = vpack.c.b16 %v1019, %v1018
  %v1031 = vpack.c.b16 %v1021, %v1020
  %v1032 = vpack.c.b16 %v1023, %v1022
  %v1033 = vpack.c.b16 %v1025, %v1024
  %1042 = vmatprep.subr.bf16.mxu0 0
  %1043 = vmatpush1.bf16.msra.mxu0 %v1026
  %1044 = vmatprep.subr.bf16.mxu0 0
  %1045 = vmatpush1.bf16.msra.mxu0 %v1027
  %1046 = vmatprep.subr.bf16.mxu0 0
  %1047 = vmatpush1.bf16.msra.mxu0 %v1028
  %1048 = vmatprep.subr.bf16.mxu0 0
  %1049 = vmatpush1.bf16.msra.mxu0 %v1029
  %1050 = vmatprep.subr.bf16.mxu0 0
  %1051 = vmatpush1.bf16.msra.mxu0 %v1030
  %1052 = vmatprep.subr.bf16.mxu0 0
  %1053 = vmatpush1.bf16.msra.mxu0 %v1031
  %1054 = vmatprep.subr.bf16.mxu0 0
  %1055 = vmatpush1.bf16.msra.mxu0 %v1032
  %1056 = vmatprep.subr.bf16.mxu0 0
  %1057 = vmatpush1.bf16.msra.mxu0 %v1033
  %1058 = vmatprep.subr.bf16.mxu0 0
  %1059 = vmatpush1.bf16.msra.mxu0 0
  %1060 = vmatprep.subr.bf16.mxu0 0
  %1061 = vmatpush1.bf16.msra.mxu0 0
  %1062 = vmatprep.subr.bf16.mxu0 0
  %1063 = vmatpush1.bf16.msra.mxu0 0
  %1064 = vmatprep.subr.bf16.mxu0 0
  %1065 = vmatpush1.bf16.msra.mxu0 0
  %1066 = vmatprep.subr.bf16.mxu0 0
  %1067 = vmatpush1.bf16.msra.mxu0 0
  %1068 = vmatprep.subr.bf16.mxu0 0
  %1069 = vmatpush1.bf16.msra.mxu0 0
  %1070 = vmatprep.subr.bf16.mxu0 0
  %1071 = vmatpush1.bf16.msra.mxu0 0
  %1072 = vmatprep.subr.bf16.mxu0 0
  %1073 = vmatpush1.bf16.msra.mxu0 0
  %1074 = vmatprep.mubr.bf16.mxu0 0
  %1075 = vmatmul.mubr.bf16.gmra.mrb[0].mxu0 %v990
  %v1076 = vpop.f32.mrb[0].mxu0
  %v1077 = vadd.f32 0.0, %v1076
  %v1078 = vpop.f32.mrb[0].mxu0
  %v1079 = vpop.f32.mrb[0].mxu0
  %v1080 = vadd.f32 0.0, %v1079
  %v1081 = vpop.f32.mrb[0].mxu0
  %1082 = vmatprep.mubr.bf16.mxu0 0
  %1083 = vmatmul.mubr.bf16.gmra.mrb[0].mxu0 %v991
  %v1084 = vpop.f32.mrb[0].mxu0
  %v1085 = vadd.f32 0.0, %v1084
  %v1086 = vpop.f32.mrb[0].mxu0
  %v1087 = vpop.f32.mrb[0].mxu0
  %v1088 = vadd.f32 0.0, %v1087
  %v1089 = vpop.f32.mrb[0].mxu0
  %1090 = vdwg.mxu0
  %v1091 = vadd.f32 %v957, %v1077
  %v1092 = vadd.f32 %v958, %v1080
  %v1093 = vadd.f32 %v959, %v1085
  %v1094 = vadd.f32 %v960, %v1088
  %v1095 = vld [vmem:[%s290 + $0x8] sm:$0xf]
  %v1096 = vld [vmem:[%s290 + $0xc] sm:$0xf]
  %v1097 = vld [vmem:[%s290 + $0x10] sm:$0xf]
  %v1098 = vld [vmem:[%s290 + $0x14] sm:$0xf]
  %s1099 = scalar_lea.vmem %s1, 512
  %v1100 = vld [vmem:[%s1099] sm:$0xf]
  %v1101 = vld [vmem:[%s1099 + $0x4] sm:$0xf]
  %v1102 = vld [vmem:[%s1099 + $0x8] sm:$0xf]
  %v1103 = vld [vmem:[%s1099 + $0xc] sm:$0xf]
  %v1104 = vld [vmem:[%s1099 + $0x10] sm:$0xf]
  %v1105 = vld [vmem:[%s1099 + $0x14] sm:$0xf]
  %v1106 = vld [vmem:[%s1099 + $0x18] sm:$0xf]
  %v1107 = vld [vmem:[%s1099 + $0x1c] sm:$0xf]
  %v1108 = vld [vmem:[%s1099 + $0x20] sm:$0xf]
  %v1109 = vld [vmem:[%s1099 + $0x24] sm:$0xf]
  %v1110 = vld [vmem:[%s1099 + $0x28] sm:$0xf]
  %v1111 = vld [vmem:[%s1099 + $0x2c] sm:$0xf]
  %v1112 = vld [vmem:[%s1099 + $0x30] sm:$0xf]
  %v1113 = vld [vmem:[%s1099 + $0x34] sm:$0xf]
  %v1114 = vld [vmem:[%s1099 + $0x38] sm:$0xf]
  %v1115 = vld [vmem:[%s1099 + $0x3c] sm:$0xf]
  %v1120 = vunpack.c.l.b16 %v1095
  %v1121 = vunpack.c.l.b16 %v1096
  %v1122 = vunpack.c.l.b16 %v1097
  %v1123 = vunpack.c.l.b16 %v1098
  %v1124 = vpack.c.b16 %v1121, %v1120
  %v1125 = vpack.c.b16 %v1123, %v1122
  %v1144 = vunpack.c.l.b16 %v1100
  %v1145 = vunpack.c.l.b16 %v1101
  %v1146 = vunpack.c.l.b16 %v1102
  %v1147 = vunpack.c.l.b16 %v1103
  %v1148 = vunpack.c.l.b16 %v1104
  %v1149 = vunpack.c.l.b16 %v1105
  %v1150 = vunpack.c.l.b16 %v1106
  %v1151 = vunpack.c.l.b16 %v1107
  %v1152 = vunpack.c.l.b16 %v1108
  %v1153 = vunpack.c.l.b16 %v1109
  %v1154 = vunpack.c.l.b16 %v1110
  %v1155 = vunpack.c.l.b16 %v1111
  %v1156 = vunpack.c.l.b16 %v1112
  %v1157 = vunpack.c.l.b16 %v1113
  %v1158 = vunpack.c.l.b16 %v1114
  %v1159 = vunpack.c.l.b16 %v1115
  %v1160 = vpack.c.b16 %v1145, %v1144
  %v1161 = vpack.c.b16 %v1147, %v1146
  %v1162 = vpack.c.b16 %v1149, %v1148
  %v1163 = vpack.c.b16 %v1151, %v1150
  %v1164 = vpack.c.b16 %v1153, %v1152
  %v1165 = vpack.c.b16 %v1155, %v1154
  %v1166 = vpack.c.b16 %v1157, %v1156
  %v1167 = vpack.c.b16 %v1159, %v1158
  %1176 = vmatprep.subr.bf16.mxu0 0
  %1177 = vmatpush1.bf16.msra.mxu0 %v1160
  %1178 = vmatprep.subr.bf16.mxu0 0
  %1179 = vmatpush1.bf16.msra.mxu0 %v1161
  %1180 = vmatprep.subr.bf16.mxu0 0
  %1181 = vmatpush1.bf16.msra.mxu0 %v1162
  %1182 = vmatprep.subr.bf16.mxu0 0
  %1183 = vmatpush1.bf16.msra.mxu0 %v1163
  %1184 = vmatprep.subr.bf16.mxu0 0
  %1185 = vmatpush1.bf16.msra.mxu0 %v1164
  %1186 = vmatprep.subr.bf16.mxu0 0
  %1187 = vmatpush1.bf16.msra.mxu0 %v1165
  %1188 = vmatprep.subr.bf16.mxu0 0
  %1189 = vmatpush1.bf16.msra.mxu0 %v1166
  %1190 = vmatprep.subr.bf16.mxu0 0
  %1191 = vmatpush1.bf16.msra.mxu0 %v1167
  %1192 = vmatprep.subr.bf16.mxu0 0
  %1193 = vmatpush1.bf16.msra.mxu0 0
  %1194 = vmatprep.subr.bf16.mxu0 0
  %1195 = vmatpush1.bf16.msra.mxu0 0
  %1196 = vmatprep.subr.bf16.mxu0 0
  %1197 = vmatpush1.bf16.msra.mxu0 0
  %1198 = vmatprep.subr.bf16.mxu0 0
  %1199 = vmatpush1.bf16.msra.mxu0 0
  %1200 = vmatprep.subr.bf16.mxu0 0
  %1201 = vmatpush1.bf16.msra.mxu0 0
  %1202 = vmatprep.subr.bf16.mxu0 0
  %1203 = vmatpush1.bf16.msra.mxu0 0
  %1204 = vmatprep.subr.bf16.mxu0 0
  %1205 = vmatpush1.bf16.msra.mxu0 0
  %1206 = vmatprep.subr.bf16.mxu0 0
  %1207 = vmatpush1.bf16.msra.mxu0 0
  %1208 = vmatprep.mubr.bf16.mxu0 0
  %1209 = vmatmul.mubr.bf16.gmra.mrb[0].mxu0 %v1124
  %v1210 = vpop.f32.mrb[0].mxu0
  %v1211 = vadd.f32 0.0, %v1210
  %v1212 = vpop.f32.mrb[0].mxu0
  %v1213 = vpop.f32.mrb[0].mxu0
  %v1214 = vadd.f32 0.0, %v1213
  %v1215 = vpop.f32.mrb[0].mxu0
  %1216 = vmatprep.mubr.bf16.mxu0 0
  %1217 = vmatmul.mubr.bf16.gmra.mrb[0].mxu0 %v1125
  %v1218 = vpop.f32.mrb[0].mxu0
  %v1219 = vadd.f32 0.0, %v1218
  %v1220 = vpop.f32.mrb[0].mxu0
  %v1221 = vpop.f32.mrb[0].mxu0
  %v1222 = vadd.f32 0.0, %v1221
  %v1223 = vpop.f32.mrb[0].mxu0
  %1224 = vdwg.mxu0
  %v1225 = vadd.f32 %v1091, %v1211
  %v1226 = vadd.f32 %v1092, %v1214
  %v1227 = vadd.f32 %v1093, %v1219
  %v1228 = vadd.f32 %v1094, %v1222
  %v1229 = vld [vmem:[%s2] sm:$0x1]
  %v1231 = vlaneseq
  %v1232 = vshrl.u32 %v1231, 7
  %v1233 = vsub.s32 0, %v1232
  %v1234 = vrot.slane %v1229, %v1233
  %v1236 = vmul.f32 %v1225, %v1234
  %v1237 = vmul.f32 %v1226, %v1234
  %v1238 = vmul.f32 %v1227, %v1234
  %v1239 = vmul.f32 %v1228, %v1234
  %v1240 = vld [vmem:[%s3] sm:$0x1]
  %v1242 = vlaneseq
  %v1243 = vshrl.u32 %v1242, 7
  %v1244 = vsub.s32 0, %v1243
  %v1245 = vrot.slane %v1240, %v1244
  %v1247 = vadd.f32 %v1236, %v1245
  %v1248 = vadd.f32 %v1237, %v1245
  %v1249 = vadd.f32 %v1238, %v1245
  %v1250 = vadd.f32 %v1239, %v1245
  %v1251 = vld [vmem:[%s4] sm:$0xf]
  %v1252 = vld [vmem:[%s4 + $0x4] sm:$0xf]
  %v1253 = vld [vmem:[%s4 + $0x8] sm:$0xf]
  %v1254 = vld [vmem:[%s4 + $0xc] sm:$0xf]
  %v1255 = vld [vmem:[%s5] sm:$0xf]
  %v1256 = vld [vmem:[%s5 + $0x4] sm:$0xf]
  %v1257 = vld [vmem:[%s5 + $0x8] sm:$0xf]
  %v1258 = vld [vmem:[%s5 + $0xc] sm:$0xf]
  %v1259 = vld [vmem:[%s5 + $0x10] sm:$0xf]
  %v1260 = vld [vmem:[%s5 + $0x14] sm:$0xf]
  %v1261 = vld [vmem:[%s5 + $0x18] sm:$0xf]
  %v1262 = vld [vmem:[%s5 + $0x1c] sm:$0xf]
  %v1267 = vunpack.c.l.b16 %v1251
  %v1268 = vunpack.c.l.b16 %v1252
  %v1269 = vunpack.c.l.b16 %v1253
  %v1270 = vunpack.c.l.b16 %v1254
  %v1271 = vpack.c.b16 %v1268, %v1267
  %v1272 = vpack.c.b16 %v1270, %v1269
  %v1281 = vunpack.c.l.b16 %v1255
  %v1282 = vunpack.c.l.b16 %v1256
  %v1283 = vunpack.c.l.b16 %v1257
  %v1284 = vunpack.c.l.b16 %v1258
  %v1285 = vunpack.c.l.b16 %v1259
  %v1286 = vunpack.c.l.b16 %v1260
  %v1287 = vunpack.c.l.b16 %v1261
  %v1288 = vunpack.c.l.b16 %v1262
  %v1289 = vpack.c.b16 %v1282, %v1281
  %v1290 = vpack.c.b16 %v1284, %v1283
  %v1291 = vpack.c.b16 %v1286, %v1285
  %v1292 = vpack.c.b16 %v1288, %v1287
  %vm1297 = vcmask 523264
  %v1299 = vsel %vm1297, %v1271, 0
  %v1302 = vsel %vm1297, %v1272, 0
  %1304 = vmatprep.subr.bf16.mxu0 0
  %1305 = vmatpush1.bf16.msra.mxu0 %v1289
  %1306 = vmatprep.subr.bf16.mxu0 0
  %1307 = vmatpush1.bf16.msra.mxu0 %v1290
  %1308 = vmatprep.subr.bf16.mxu0 0
  %1309 = vmatpush1.bf16.msra.mxu0 %v1291
  %1310 = vmatprep.subr.bf16.mxu0 0
  %1311 = vmatpush1.bf16.msra.mxu0 %v1292
  %1312 = vmatprep.subr.bf16.mxu0 0
  %1313 = vmatpush1.bf16.msra.mxu0 0
  %1314 = vmatprep.subr.bf16.mxu0 0
  %1315 = vmatpush1.bf16.msra.mxu0 0
  %1316 = vmatprep.subr.bf16.mxu0 0
  %1317 = vmatpush1.bf16.msra.mxu0 0
  %1318 = vmatprep.subr.bf16.mxu0 0
  %1319 = vmatpush1.bf16.msra.mxu0 0
  %1320 = vmatprep.subr.bf16.mxu0 0
  %1321 = vmatpush1.bf16.msra.mxu0 0
  %1322 = vmatprep.subr.bf16.mxu0 0
  %1323 = vmatpush1.bf16.msra.mxu0 0
  %1324 = vmatprep.subr.bf16.mxu0 0
  %1325 = vmatpush1.bf16.msra.mxu0 0
  %1326 = vmatprep.subr.bf16.mxu0 0
  %1327 = vmatpush1.bf16.msra.mxu0 0
  %1328 = vmatprep.subr.bf16.mxu0 0
  %1329 = vmatpush1.bf16.msra.mxu0 0
  %1330 = vmatprep.subr.bf16.mxu0 0
  %1331 = vmatpush1.bf16.msra.mxu0 0
  %1332 = vmatprep.subr.bf16.mxu0 0
  %1333 = vmatpush1.bf16.msra.mxu0 0
  %1334 = vmatprep.subr.bf16.mxu0 0
  %1335 = vmatpush1.bf16.msra.mxu0 0
  %1336 = vmatprep.mubr.bf16.mxu0 0
  %1337 = vmatmul.mubr.bf16.gmra.mrb[0].mxu0 %v1299
  %v1338 = vpop.f32.mrb[0].mxu0
  %v1339 = vadd.f32 0.0, %v1338
  %v1340 = vpop.f32.mrb[0].mxu0
  %v1341 = vpop.f32.mrb[0].mxu0
  %v1342 = vadd.f32 0.0, %v1341
  %v1343 = vpop.f32.mrb[0].mxu0
  %1344 = vmatprep.mubr.bf16.mxu0 0
  %1345 = vmatmul.mubr.bf16.gmra.mrb[0].mxu0 %v1302
  %v1346 = vpop.f32.mrb[0].mxu0
  %v1347 = vadd.f32 0.0, %v1346
  %v1348 = vpop.f32.mrb[0].mxu0
  %v1349 = vpop.f32.mrb[0].mxu0
  %v1350 = vadd.f32 0.0, %v1349
  %v1351 = vpop.f32.mrb[0].mxu0
  %1352 = vdwg.mxu0
  %v1353 = vld [vmem:[%s6] sm:$0x1]
  %v1355 = vlaneseq
  %v1356 = vshrl.u32 %v1355, 7
  %v1357 = vsub.s32 0, %v1356
  %v1358 = vrot.slane %v1353, %v1357
  %v1360 = vmul.f32 %v1339, %v1358
  %v1361 = vmul.f32 %v1342, %v1358
  %v1362 = vmul.f32 %v1347, %v1358
  %v1363 = vmul.f32 %v1350, %v1358
  %v1364 = vld [vmem:[%s7] sm:$0x1]
  %v1366 = vlaneseq
  %v1367 = vshrl.u32 %v1366, 7
  %v1368 = vsub.s32 0, %v1367
  %v1369 = vrot.slane %v1364, %v1368
  %v1371 = vadd.f32 %v1360, %v1369
  %v1372 = vadd.f32 %v1361, %v1369
  %v1373 = vadd.f32 %v1362, %v1369
  %v1374 = vadd.f32 %v1363, %v1369
  %v1375 = vadd.f32 %v1247, %v1371
  %v1376 = vadd.f32 %v1248, %v1372
  %v1377 = vadd.f32 %v1249, %v1373
  %v1378 = vadd.f32 %v1250, %v1374
  %v1379 = vmax.f32 %v1375, 0.0
  %v1380 = vmax.f32 %v1376, 0.0
  %v1381 = vmax.f32 %v1377, 0.0
  %v1382 = vmax.f32 %v1378, 0.0
  %v1383 = vpack.c.bf16 %v1380, %v1379
  %v1384 = vpack.c.bf16 %v1382, %v1381
  %v1387 = vunpack.c.l.b16 %v1383
  %v1388 = vunpack.c.h.b16 %v1383
  %v1389 = vunpack.c.l.b16 %v1384
  %v1390 = vunpack.c.h.b16 %v1384
  %v1391 = vpack.c.b16 %v1387, %v1387
  %v1392 = vpack.c.b16 %v1388, %v1388
  %v1393 = vpack.c.b16 %v1389, %v1389
  %v1394 = vpack.c.b16 %v1390, %v1390
  %1399 = vst [vmem:[%s8] sm:$0xf] %v1391
  %1400 = vst [vmem:[%s8 + $0x4] sm:$0xf] %v1392
  %1401 = vst [vmem:[%s8 + $0x8] sm:$0xf] %v1393
  %1402 = vst [vmem:[%s8 + $0xc] sm:$0xf] %v1394
  // Predicated region
  $region34: #{_lambda_.3} parent=0 // pred_check
    _
  $region35: #{_lambda_.3} parent=0 // pred_check_branch
    %1404 = sbr.rel (0) target = $region37
  $region36: #{_lambda_.3} parent=0 // pred_region
    _
  $region37: #{_lambda_.3} parent=0 // pred_fallthru
    _
  // Predicated region
  $region38: #{_lambda_.3} parent=0 // pred_check
    _
  $region39: #{_lambda_.3} parent=0 // pred_check_branch
    %1406 = sbr.rel (0) target = $region41
  $region40: #{_lambda_.3} parent=0 // pred_region
    _
  $region41: #{_lambda_.3} parent=0 // pred_fallthru
    _

</llo_original>
